<compile_context>
chip_gen: v5e
topology: v5e:2x2
jax: 0.10.0
libtpu: 0.0.40
codegen_flags: <defaults>
</compile_context>

<pallas_src>
import functools

import jax
import jax.numpy as jnp
from jax.experimental import pallas as pl
from jax.experimental.pallas import tpu as pltpu


_VMEM_LIMIT = 32 * 1024 * 1024  # explicit scoped-VMEM budget; safe on v5e/v6e/v7x


def _round_up(x, m):
    return (x + m - 1) // m * m


def _row_tiling(m):
    if m <= 256:
        tm = _round_up(m, 8)
        return tm, tm
    return 256, _round_up(m, 256)


def _col_tiling(n):
    # Pad N up to the tile so the output is always lane-dense and the grid
    # over N stays short even for "awkward" widths like 2*1025.
    if n <= 512:
        tn = _round_up(n, 128)
        return tn, tn
    tn = 512
    return tn, _round_up(n, tn)


# ----------------------------------------------------------------------------
# Gridded matmul + bias (+ReLU):  out = relu(A @ W + b)
#   A (M,K) bf16, W (K,N) bf16, b (1,N) f32 -> out (M,N) f32.
# ----------------------------------------------------------------------------
def _matmul_bias_kernel(a_ref, w_ref, b_ref, o_ref, *, relu):
    acc = jnp.dot(a_ref[...], w_ref[...], preferred_element_type=jnp.float32)
    acc = acc + b_ref[...]
    if relu:
        acc = jnp.maximum(acc, 0.0)
    o_ref[...] = acc.astype(o_ref.dtype)


def matmul_bias(a, w, b, relu=False):
    M, K = a.shape
    N = w.shape[1]

    tm, Mp = _row_tiling(M)
    tn, Np = _col_tiling(N)

    a_p = jnp.pad(a, ((0, Mp - M), (0, 0))).astype(jnp.bfloat16)
    w_p = jnp.pad(w, ((0, 0), (0, Np - N))).astype(jnp.bfloat16)
    b_p = jnp.pad(b.reshape(1, N), ((0, 0), (0, Np - N))).astype(jnp.float32)

    cost = pl.CostEstimate(
        flops=2 * Mp * Np * K,
        transcendentals=0,
        bytes_accessed=Mp * K * 2 + K * Np * 2 + Np * 4 + Mp * Np * 4)

    out = pl.pallas_call(
        functools.partial(_matmul_bias_kernel, relu=relu),
        out_shape=jax.ShapeDtypeStruct((Mp, Np), jnp.float32),
        grid_spec=pltpu.PrefetchScalarGridSpec(
            num_scalar_prefetch=0,
            grid=(Mp // tm, Np // tn),
            in_specs=[
                pl.BlockSpec((tm, K), lambda i, j: (i, 0)),
                pl.BlockSpec((K, tn), lambda i, j: (0, j)),
                pl.BlockSpec((1, tn), lambda i, j: (0, j)),
            ],
            out_specs=pl.BlockSpec((tm, tn), lambda i, j: (i, j)),
        ),
        compiler_params=pltpu.CompilerParams(
            dimension_semantics=("parallel", "parallel"),
            vmem_limit_bytes=_VMEM_LIMIT),
        cost_estimate=cost,
    )(a_p, w_p, b_p)
    return out[:M, :N]


# ----------------------------------------------------------------------------
# Fused residual layer:  out = x + Conv1x1(ReLU(Conv3(ReLU(x)) + b1)) + b2
#   patches = im2col(ReLU(x)) done in XLA glue; both matmuls + ReLU + residual
#   add run in one kernel, RH-wide intermediate stays in VMEM/regs.
# ----------------------------------------------------------------------------
def _residual_kernel(p_ref, w1_ref, b1_ref, w2_ref, b2_ref, x_ref, o_ref):
    h = jnp.dot(p_ref[...], w1_ref[...], preferred_element_type=jnp.float32)
    h = jnp.maximum(h + b1_ref[...], 0.0)
    y = jnp.dot(h.astype(jnp.bfloat16), w2_ref[...],
                preferred_element_type=jnp.float32)
    o_ref[...] = y + b2_ref[...] + x_ref[...]


def residual_layer(x, w1, b1, w2, b2):
    """x: (B, T, H); w1: (RH, H, 3); w2: (H, RH, 1) — torch Conv1d layouts."""
    B, T, H = x.shape
    RH = w1.shape[0]

    xr = jax.nn.relu(x)                                    # ReLU commutes with im2col
    xp = jnp.pad(xr, ((0, 0), (1, 1), (0, 0)))
    patches = jnp.concatenate([xp[:, k:k + T, :] for k in range(3)], axis=-1)
    w1m = jnp.transpose(w1, (2, 1, 0)).reshape(3 * H, RH)
    w2m = jnp.transpose(w2, (2, 1, 0)).reshape(RH, H)

    M = B * T
    tm, Mp = _row_tiling(M)
    Np = _round_up(H, 128)

    p_p = jnp.pad(patches.reshape(M, 3 * H), ((0, Mp - M), (0, 0))).astype(jnp.bfloat16)
    x_p = jnp.pad(x.reshape(M, H), ((0, Mp - M), (0, Np - H))).astype(jnp.float32)
    w1_p = w1m.astype(jnp.bfloat16)
    b1_p = b1.reshape(1, RH).astype(jnp.float32)
    w2_p = jnp.pad(w2m, ((0, 0), (0, Np - H))).astype(jnp.bfloat16)
    b2_p = jnp.pad(b2.reshape(1, H), ((0, 0), (0, Np - H))).astype(jnp.float32)

    cost = pl.CostEstimate(
        flops=2 * Mp * RH * 3 * H + 2 * Mp * Np * RH,
        transcendentals=0,
        bytes_accessed=Mp * 3 * H * 2 + 2 * Mp * Np * 4 + 3 * H * RH * 2 + RH * Np * 2)

    out = pl.pallas_call(
        _residual_kernel,
        out_shape=jax.ShapeDtypeStruct((Mp, Np), jnp.float32),
        grid_spec=pltpu.PrefetchScalarGridSpec(
            num_scalar_prefetch=0,
            grid=(Mp // tm,),
            in_specs=[
                pl.BlockSpec((tm, 3 * H), lambda i: (i, 0)),
                pl.BlockSpec((3 * H, RH), lambda i: (0, 0)),
                pl.BlockSpec((1, RH), lambda i: (0, 0)),
                pl.BlockSpec((RH, Np), lambda i: (0, 0)),
                pl.BlockSpec((1, Np), lambda i: (0, 0)),
                pl.BlockSpec((tm, Np), lambda i: (i, 0)),
            ],
            out_specs=pl.BlockSpec((tm, Np), lambda i: (i, 0)),
        ),
        compiler_params=pltpu.CompilerParams(
            dimension_semantics=("parallel",),
            vmem_limit_bytes=_VMEM_LIMIT),
        cost_estimate=cost,
    )(p_p, w1_p, b1_p, w2_p, b2_p, x_p)
    return out[:M, :H].reshape(B, T, H)


def residual_stack(x, layers):
    for (w1, b1, w2, b2) in layers:
        x = residual_layer(x, w1, b1, w2, b2)
    return jax.nn.relu(x)


# ----------------------------------------------------------------------------
# Vector quantizer: gridded over rows, codebook resident, accumulators for
# sum(diff^2) and per-code counts in VMEM scratch (grid axis 'arbitrary');
# loss / perplexity transcendentals only evaluated on the final step.
# ----------------------------------------------------------------------------
def _vq_kernel(z_ref, e_ref, q_ref, loss_ref, perp_ref, cnt_ref, sse_ref,
               *, commitment_cost, n_valid):
    step = pl.program_id(0)

    @pl.when(step == 0)
    def _():
        cnt_ref[...] = jnp.zeros_like(cnt_ref)
        sse_ref[...] = jnp.zeros_like(sse_ref)

    z = z_ref[...]                                     # (tr, D) f32 (keep f32: v5e VPU/EUP)
    e = e_ref[...]                                     # (K, D) f32 codebook
    tr = z.shape[0]
    d_dim = z.shape[1]
    n_codes = e.shape[0]

    z_sq = jnp.sum(z * z, axis=1, keepdims=True)       # (tr, 1)
    e_sq = jnp.sum(e * e, axis=1).reshape(1, n_codes)  # (1, K)
    cross = jax.lax.dot_general(                       # (tr, K) = z @ e^T on MXU
        z, e, (((1,), (1,)), ((), ())), preferred_element_type=jnp.float32)
    d = z_sq + e_sq - 2.0 * cross                      # squared L2 distances

    dmin = jnp.min(d, axis=1, keepdims=True)
    col = jax.lax.broadcasted_iota(jnp.int32, d.shape, 1)
    cand = jnp.where(d <= dmin, col, n_codes)
    idx = jnp.min(cand, axis=1, keepdims=True)         # first-argmin tie-break
    enc = (col == idx).astype(jnp.float32)             # one-hot (tr, K)

    q = jnp.dot(enc, e, preferred_element_type=jnp.float32)
    q_ref[...] = q

    row = jax.lax.broadcasted_iota(jnp.int32, (tr, 1), 0) + step * tr
    valid = (row < n_valid).astype(jnp.float32)        # mask padded rows

    diff = (q - z) * valid
    sse_ref[...] += jnp.broadcast_to(jnp.sum(diff * diff), (1, 1))
    cnt_ref[...] += jnp.sum(enc * valid, axis=0, keepdims=True)

    # forward value of q_latent_loss + commitment_cost * e_latent_loss;
    # finalized once on the last grid step.
    @pl.when(step == pl.num_programs(0) - 1)
    def _():
        mse = sse_ref[...] / float(n_valid * d_dim)
        loss_ref[...] = (1.0 + commitment_cost) * mse
        avg = cnt_ref[...] / float(n_valid)
        ent = jnp.sum(avg * jnp.log(avg + 1e-10), axis=1, keepdims=True)
        perp_ref[...] = jnp.exp(-ent)


def vector_quantize(z_flat, codebook, commitment_cost):
    N, D = z_flat.shape
    Kc = codebook.shape[0]

    if N <= 512:
        tr = _round_up(N, 8)
        Nrp = tr
    else:
        tr = 512
        Nrp = _round_up(N, tr)

    z_p = jnp.pad(z_flat, ((0, Nrp - N), (0, 0))).astype(jnp.float32)
    e = codebook.astype(jnp.float32)

    cost = pl.CostEstimate(
        flops=4 * Nrp * Kc * D,
        transcendentals=Kc + 1,
        bytes_accessed=2 * Nrp * D * 4 + Kc * D * 4)

    q, loss, perp = pl.pallas_call(
        functools.partial(_vq_kernel, commitment_cost=float(commitment_cost),
                          n_valid=N),
        out_shape=(jax.ShapeDtypeStruct((Nrp, D), jnp.float32),
                   jax.ShapeDtypeStruct((1, 1), jnp.float32),
                   jax.ShapeDtypeStruct((1, 1), jnp.float32)),
        grid_spec=pltpu.PrefetchScalarGridSpec(
            num_scalar_prefetch=0,
            grid=(Nrp // tr,),
            in_specs=[
                pl.BlockSpec((tr, D), lambda i: (i, 0)),
                pl.BlockSpec((Kc, D), lambda i: (0, 0)),   # codebook resident
            ],
            out_specs=(
                pl.BlockSpec((tr, D), lambda i: (i, 0)),
                pl.BlockSpec((1, 1), lambda i: (0, 0)),
                pl.BlockSpec((1, 1), lambda i: (0, 0)),
            ),
            scratch_shapes=[pltpu.VMEM((1, Kc), jnp.float32),   # per-code counts
                            pltpu.VMEM((1, 1), jnp.float32)],   # sum of squared err
        ),
        compiler_params=pltpu.CompilerParams(
            dimension_semantics=("arbitrary",),
            vmem_limit_bytes=_VMEM_LIMIT),
        cost_estimate=cost,
    )(z_p, e)
    return q[:N], loss[0, 0], perp[0, 0]


# ----------------------------------------------------------------------------
# Conv helpers (im2col glue + Pallas matmul; glue fuses under jit)
# ----------------------------------------------------------------------------
def conv1d(x, w, b, stride=1, padding=0, relu=False):
    """x: (B, T, Cin); w: (Cout, Cin, K) torch Conv1d layout; b: (Cout,)."""
    # TODO(synk): could fold the K-tap im2col into the kernel (pl.ds shifted
    # loads) to cut activation HBM traffic further for very long sequences.
    B, T, Cin = x.shape
    Cout, _, K = w.shape
    xp = jnp.pad(x, ((0, 0), (padding, padding), (0, 0)))
    Tout = (T + 2 * padding - K) // stride + 1
    cols = [xp[:, k:k + stride * Tout:stride, :] for k in range(K)]
    patches = jnp.concatenate(cols, axis=-1)              # (B, Tout, K*Cin)
    wm = jnp.transpose(w, (2, 1, 0)).reshape(K * Cin, Cout)
    out = matmul_bias(patches.reshape(B * Tout, K * Cin), wm, b, relu=relu)
    return out.reshape(B, Tout, Cout)


def conv_transpose1d_s2k4(x, w_t, b, padding, relu=False):
    """Polyphase ConvTranspose1d, stride=2, kernel=4, padding in {0, 1}.
    x: (B, T, Cin); w_t: (Cin, Cout, 4) torch ConvTranspose1d layout.
    Both output phases come from the same 2-tap window [x[m-1], x[m]], so a
    single matmul with a (2*Cin, 2*Cout) weight produces them; outputs are
    interleaved afterwards.  Half the FLOPs of zero-upsample + full conv."""
    B, T, Cin = x.shape
    _, Cout, K = w_t.shape
    assert K == 4 and padding in (0, 1)

    xp = jnp.pad(x, ((0, 0), (1, 1), (0, 0)))              # x[-1]=0, x[T]=0
    patches = jnp.concatenate([xp[:, 0:T + 1, :], xp[:, 1:T + 2, :]], axis=-1)

    w_even = jnp.concatenate([w_t[:, :, 2], w_t[:, :, 0]], axis=0)   # (2Cin, Cout)
    w_odd = jnp.concatenate([w_t[:, :, 3], w_t[:, :, 1]], axis=0)
    w_ab = jnp.concatenate([w_even, w_odd], axis=1)                  # (2Cin, 2Cout)
    b_ab = jnp.concatenate([b, b], axis=0)

    out = matmul_bias(patches.reshape(B * (T + 1), 2 * Cin), w_ab, b_ab, relu=relu)
    out = out.reshape(B, T + 1, 2 * Cout)
    a_ph = out[:, :, :Cout]      # even phase:  y[2m - padding]
    b_ph = out[:, :, Cout:]      # odd phase:   y[2m + 1 - padding]

    if padding == 0:
        y = jnp.stack([a_ph, b_ph], axis=2).reshape(B, 2 * (T + 1), Cout)
    else:  # padding == 1
        y = jnp.stack([b_ph[:, :T, :], a_ph[:, 1:T + 1, :]], axis=2)
        y = y.reshape(B, 2 * T, Cout)
    return y


# ----------------------------------------------------------------------------
# Parameters (deterministic synthetic init)
# ----------------------------------------------------------------------------
def init_params(key, H, R, RH, K_emb, D, num_speakers, S):
    keys = iter(jax.random.split(key, 64))

    def w(shape, scale=0.05):
        return scale * jax.random.normal(next(keys), shape, jnp.float32)

    p = {}
    # Encoder: Conv1d(1,H/2,4,s2,p1) -> Conv1d(H/2,H,4,s2,p1) -> Conv1d(H,H,3,p1) -> residual stack
    p['enc_c1_w'] = w((H // 2, 1, 4));     p['enc_c1_b'] = w((H // 2,))
    p['enc_c2_w'] = w((H, H // 2, 4));     p['enc_c2_b'] = w((H,))
    p['enc_c3_w'] = w((H, H, 3));          p['enc_c3_b'] = w((H,))
    p['enc_res'] = [(w((RH, H, 3)), jnp.zeros((RH,), jnp.float32),
                     w((H, RH, 1)), jnp.zeros((H,), jnp.float32)) for _ in range(R)]
    # pre-VQ 1x1 conv
    p['prevq_w'] = w((D, H, 1));           p['prevq_b'] = w((D,))
    # VQ codebook
    p['codebook'] = jax.random.uniform(next(keys), (K_emb, D), jnp.float32,
                                       -1.0 / K_emb, 1.0 / K_emb)
    # speaker embedding
    p['spk_emb'] = w((num_speakers, S))
    # Decoder: Conv1d(D+S,H,3,p1) -> residual stack -> ConvT(H,H/2,4,s2,p1) -> ConvT(H/2,1025,4,s2,p0)
    p['dec_c1_w'] = w((H, D + S, 3));      p['dec_c1_b'] = w((H,))
    p['dec_res'] = [(w((RH, H, 3)), jnp.zeros((RH,), jnp.float32),
                     w((H, RH, 1)), jnp.zeros((H,), jnp.float32)) for _ in range(R)]
    p['dec_t1_w'] = w((H, H // 2, 4));     p['dec_t1_b'] = w((H // 2,))
    p['dec_t2_w'] = w((H // 2, 1025, 4));  p['dec_t2_b'] = w((1025,))
    return p


# ----------------------------------------------------------------------------
# Model forward (mirrors Model.forward)
# ----------------------------------------------------------------------------
def model_forward(params, x_ncw, speaker_id, commitment_cost):
    B, _, T = x_ncw.shape
    x = jnp.transpose(x_ncw, (0, 2, 1))                    # (B, T, 1)

    # Encoder
    h = conv1d(x, params['enc_c1_w'], params['enc_c1_b'], stride=2, padding=1, relu=True)
    h = conv1d(h, params['enc_c2_w'], params['enc_c2_b'], stride=2, padding=1, relu=True)
    h = conv1d(h, params['enc_c3_w'], params['enc_c3_b'], stride=1, padding=1, relu=False)
    z = residual_stack(h, params['enc_res'])

    # pre-VQ conv (1x1)
    z = conv1d(z, params['prevq_w'], params['prevq_b'], stride=1, padding=0, relu=False)
    Bz, Tz, D = z.shape

    # Vector quantizer (gridded Pallas kernel)
    q_flat, loss, perplexity = vector_quantize(
        z.reshape(Bz * Tz, D), params['codebook'], commitment_cost)
    quantized = q_flat.reshape(Bz, Tz, D)
    # TODO(synk): straight-through custom_vjp / split q- & e-latent losses only
    # matter for training gradients; forward values match the PyTorch module.

    # Decoder with speaker conditioning
    # TODO(synk): speaker_dic name->index lookup happens host-side; kernel gets int ids.
    spk = jnp.take(params['spk_emb'], speaker_id, axis=0)  # (B, S)
    spk = jnp.broadcast_to(spk[:, None, :], (Bz, Tz, spk.shape[-1]))
    d_in = jnp.concatenate([quantized, spk], axis=-1)      # (B, T', D+S)

    h = conv1d(d_in, params['dec_c1_w'], params['dec_c1_b'], stride=1, padding=1, relu=False)
    h = residual_stack(h, params['dec_res'])
    h = conv_transpose1d_s2k4(h, params['dec_t1_w'], params['dec_t1_b'], padding=1, relu=True)
    x_recon = conv_transpose1d_s2k4(h, params['dec_t2_w'], params['dec_t2_b'], padding=0, relu=False)

    # back to PyTorch NCW: (B, 1025, T_out)
    x_recon = jnp.transpose(x_recon, (0, 2, 1))
    input_features_size = T
    output_features_size = x_recon.shape[2]
    x_recon = x_recon.reshape(-1, 1025, output_features_size)
    trim = output_features_size - input_features_size
    if trim > 0:   # guard the ':-0' empty-slice bug of the reference module
        x_recon = x_recon[:, :, :input_features_size]
    return loss, x_recon, perplexity


# ----------------------------------------------------------------------------
if __name__ == "__main__":
    # small hyperparams consistent with the module's __init__
    num_hiddens, num_residual_layers, num_residual_hiddens = 40, 2, 16
    num_embeddings, embedding_dim = 64, 32
    commitment_cost = 0.25
    speaker_embedding_dim = 8
    speaker_dic = {f"spk{i}": i for i in range(4)}

    root = jax.random.PRNGKey(0)
    kparams, kx = jax.random.split(root)
    params = init_params(kparams, num_hiddens, num_residual_layers,
                         num_residual_hiddens, num_embeddings, embedding_dim,
                         len(speaker_dic), speaker_embedding_dim)

    B, T = 2, 16                                           # T divisible by 4
    x = jax.random.normal(kx, (B, 1, T), jnp.float32)      # PyTorch NCW input
    speaker_id = jnp.array([speaker_dic["spk0"], speaker_dic["spk2"]], jnp.int32)

    fwd = jax.jit(functools.partial(model_forward, commitment_cost=commitment_cost))
    loss, x_recon, perplexity = fwd(params, x, speaker_id)
    jax.block_until_ready((loss, x_recon, perplexity))

    assert x_recon.shape == (B, 1025, T), x_recon.shape
    assert loss.shape == () and perplexity.shape == ()
    print("KERNEL_OK")
</pallas_src>

<mosaic_0001>
module attributes {stable_mosaic.version = 11 : i64} {
  func.func @_matmul_bias_kernel(%arg0: i32, %arg1: i32, %arg2: memref<16x4xbf16, #tpu.memory_space<vmem>>, %arg3: memref<4x128xbf16, #tpu.memory_space<vmem>>, %arg4: memref<1x128xf32, #tpu.memory_space<vmem>>, %arg5: memref<16x128xf32, #tpu.memory_space<vmem>>) attributes {dimension_semantics = [#tpu.dimension_semantics<parallel>, #tpu.dimension_semantics<parallel>], iteration_bounds = array<i64: 1, 1>, scalar_prefetch = 0 : i64, scratch_operands = 0 : i64, tpu.core_type = #tpu.core_type<tc>, window_params = [{transform_indices = @transform_0, window_bounds = array<i64: 16, 4>}, {transform_indices = @transform_1, window_bounds = array<i64: 4, 128>}, {transform_indices = @transform_2, window_bounds = array<i64: 1, 128>}, {transform_indices = @transform_3, window_bounds = array<i64: 16, 128>}]} {
    %c0 = arith.constant 0 : index
    %c0_0 = arith.constant 0 : index
    %0 = vector.load %arg2[%c0, %c0_0] : memref<16x4xbf16, #tpu.memory_space<vmem>>, vector<16x4xbf16>
    %c0_1 = arith.constant 0 : index
    %c0_2 = arith.constant 0 : index
    %1 = vector.load %arg3[%c0_1, %c0_2] : memref<4x128xbf16, #tpu.memory_space<vmem>>, vector<4x128xbf16>
    %cst = arith.constant dense<0.000000e+00> : vector<16x128xf32>
    %2 = tpu.matmul %0, %1, %cst {dimension_numbers = #tpu.dot_dimension_numbers<[1], [0], [0], [1], [0, 0, 1, 1], [], []>} : vector<16x4xbf16>, vector<4x128xbf16>, vector<16x128xf32> -> vector<16x128xf32>
    %c0_3 = arith.constant 0 : index
    %c0_4 = arith.constant 0 : index
    %3 = vector.load %arg4[%c0_3, %c0_4] : memref<1x128xf32, #tpu.memory_space<vmem>>, vector<1x128xf32>
    %4 = vector.broadcast %3 : vector<1x128xf32> to vector<16x128xf32>
    %5 = arith.addf %2, %4 : vector<16x128xf32>
    %cst_5 = arith.constant 0.000000e+00 : f32
    %6 = vector.broadcast %cst_5 : f32 to vector<16x128xf32>
    %7 = arith.maximumf %5, %6 : vector<16x128xf32>
    %c0_6 = arith.constant 0 : index
    %c0_7 = arith.constant 0 : index
    %8 = vector.load %arg5[%c0_6, %c0_7] : memref<16x128xf32, #tpu.memory_space<vmem>>, vector<16x128xf32>
    tpu.vector_store %arg5[%c0_6, %c0_7], %7 {strides = array<i32>} : memref<16x128xf32, #tpu.memory_space<vmem>>, vector<16x128xf32>,
    return
  }
  func.func @transform_0(%arg0: i32, %arg1: i32) -> (i32, i32) {
    %c0_i32 = arith.constant 0 : i32
    %c0_i32_0 = arith.constant 0 : i32
    return %arg0, %c0_i32 : i32, i32
  }
  func.func @transform_1(%arg0: i32, %arg1: i32) -> (i32, i32) {
    %c0_i32 = arith.constant 0 : i32
    %c0_i32_0 = arith.constant 0 : i32
    return %c0_i32, %arg1 : i32, i32
  }
  func.func @transform_2(%arg0: i32, %arg1: i32) -> (i32, i32) {
    %c0_i32 = arith.constant 0 : i32
    %c0_i32_0 = arith.constant 0 : i32
    return %c0_i32, %arg1 : i32, i32
  }
  func.func @transform_3(%arg0: i32, %arg1: i32) -> (i32, i32) {
    %c0_i32 = arith.constant 0 : i32
    return %arg0, %arg1 : i32, i32
  }
}

module attributes {stable_mosaic.version = 11 : i64} {
  func.func @_matmul_bias_kernel(%arg0: i32, %arg1: i32, %arg2: memref<8x80xbf16, #tpu.memory_space<vmem>>, %arg3: memref<80x128xbf16, #tpu.memory_space<vmem>>, %arg4: memref<1x128xf32, #tpu.memory_space<vmem>>, %arg5: memref<8x128xf32, #tpu.memory_space<vmem>>) attributes {dimension_semantics = [#tpu.dimension_semantics<parallel>, #tpu.dimension_semantics<parallel>], iteration_bounds = array<i64: 1, 1>, scalar_prefetch = 0 : i64, scratch_operands = 0 : i64, tpu.core_type = #tpu.core_type<tc>, window_params = [{transform_indices = @transform_0, window_bounds = array<i64: 8, 80>}, {transform_indices = @transform_1, window_bounds = array<i64: 80, 128>}, {transform_indices = @transform_2, window_bounds = array<i64: 1, 128>}, {transform_indices = @transform_3, window_bounds = array<i64: 8, 128>}]} {
    %c0 = arith.constant 0 : index
    %c0_0 = arith.constant 0 : index
    %0 = vector.load %arg2[%c0, %c0_0] : memref<8x80xbf16, #tpu.memory_space<vmem>>, vector<8x80xbf16>
    %c0_1 = arith.constant 0 : index
    %c0_2 = arith.constant 0 : index
    %1 = vector.load %arg3[%c0_1, %c0_2] : memref<80x128xbf16, #tpu.memory_space<vmem>>, vector<80x128xbf16>
    %cst = arith.constant dense<0.000000e+00> : vector<8x128xf32>
    %2 = tpu.matmul %0, %1, %cst {dimension_numbers = #tpu.dot_dimension_numbers<[1], [0], [0], [1], [0, 0, 1, 1], [], []>} : vector<8x80xbf16>, vector<80x128xbf16>, vector<8x128xf32> -> vector<8x128xf32>
    %c0_3 = arith.constant 0 : index
    %c0_4 = arith.constant 0 : index
    %3 = vector.load %arg4[%c0_3, %c0_4] : memref<1x128xf32, #tpu.memory_space<vmem>>, vector<1x128xf32>
    %4 = vector.broadcast %3 : vector<1x128xf32> to vector<8x128xf32>
    %5 = arith.addf %2, %4 : vector<8x128xf32>
    %cst_5 = arith.constant 0.000000e+00 : f32
    %6 = vector.broadcast %cst_5 : f32 to vector<8x128xf32>
    %7 = arith.maximumf %5, %6 : vector<8x128xf32>
    %c0_6 = arith.constant 0 : index
    %c0_7 = arith.constant 0 : index
    %8 = vector.load %arg5[%c0_6, %c0_7] : memref<8x128xf32, #tpu.memory_space<vmem>>, vector<8x128xf32>
    tpu.vector_store %arg5[%c0_6, %c0_7], %7 {strides = array<i32>} : memref<8x128xf32, #tpu.memory_space<vmem>>, vector<8x128xf32>,
    return
  }
  func.func @transform_0(%arg0: i32, %arg1: i32) -> (i32, i32) {
    %c0_i32 = arith.constant 0 : i32
    %c0_i32_0 = arith.constant 0 : i32
    return %arg0, %c0_i32 : i32, i32
  }
  func.func @transform_1(%arg0: i32, %arg1: i32) -> (i32, i32) {
    %c0_i32 = arith.constant 0 : i32
    %c0_i32_0 = arith.constant 0 : i32
    return %c0_i32, %arg1 : i32, i32
  }
  func.func @transform_2(%arg0: i32, %arg1: i32) -> (i32, i32) {
    %c0_i32 = arith.constant 0 : i32
    %c0_i32_0 = arith.constant 0 : i32
    return %c0_i32, %arg1 : i32, i32
  }
  func.func @transform_3(%arg0: i32, %arg1: i32) -> (i32, i32) {
    %c0_i32 = arith.constant 0 : i32
    return %arg0, %arg1 : i32, i32
  }
}

module attributes {stable_mosaic.version = 11 : i64} {
  func.func @_residual_kernel(%arg0: i32, %arg1: memref<8x120xbf16, #tpu.memory_space<vmem>>, %arg2: memref<120x16xbf16, #tpu.memory_space<vmem>>, %arg3: memref<1x16xf32, #tpu.memory_space<vmem>>, %arg4: memref<16x128xbf16, #tpu.memory_space<vmem>>, %arg5: memref<1x128xf32, #tpu.memory_space<vmem>>, %arg6: memref<8x128xf32, #tpu.memory_space<vmem>>, %arg7: memref<8x128xf32, #tpu.memory_space<vmem>>) attributes {dimension_semantics = [#tpu.dimension_semantics<parallel>], iteration_bounds = array<i64: 1>, scalar_prefetch = 0 : i64, scratch_operands = 0 : i64, tpu.core_type = #tpu.core_type<tc>, window_params = [{transform_indices = @transform_0, window_bounds = array<i64: 8, 120>}, {pipeline_mode = #tpu.pipeline_mode<synchronous>, transform_indices = @transform_1, window_bounds = array<i64: 120, 16>}, {pipeline_mode = #tpu.pipeline_mode<synchronous>, transform_indices = @transform_2, window_bounds = array<i64: 1, 16>}, {pipeline_mode = #tpu.pipeline_mode<synchronous>, transform_indices = @transform_3, window_bounds = array<i64: 16, 128>}, {pipeline_mode = #tpu.pipeline_mode<synchronous>, transform_indices = @transform_4, window_bounds = array<i64: 1, 128>}, {transform_indices = @transform_5, window_bounds = array<i64: 8, 128>}, {transform_indices = @transform_6, window_bounds = array<i64: 8, 128>}]} {
    %c0 = arith.constant 0 : index
    %c0_0 = arith.constant 0 : index
    %0 = vector.load %arg1[%c0, %c0_0] : memref<8x120xbf16, #tpu.memory_space<vmem>>, vector<8x120xbf16>
    %c0_1 = arith.constant 0 : index
    %c0_2 = arith.constant 0 : index
    %1 = vector.load %arg2[%c0_1, %c0_2] : memref<120x16xbf16, #tpu.memory_space<vmem>>, vector<120x16xbf16>
    %cst = arith.constant dense<0.000000e+00> : vector<8x16xf32>
    %2 = tpu.matmul %0, %1, %cst {dimension_numbers = #tpu.dot_dimension_numbers<[1], [0], [0], [1], [0, 0, 1, 1], [], []>} : vector<8x120xbf16>, vector<120x16xbf16>, vector<8x16xf32> -> vector<8x16xf32>
    %c0_3 = arith.constant 0 : index
    %c0_4 = arith.constant 0 : index
    %3 = vector.load %arg3[%c0_3, %c0_4] : memref<1x16xf32, #tpu.memory_space<vmem>>, vector<1x16xf32>
    %4 = vector.broadcast %3 : vector<1x16xf32> to vector<8x16xf32>
    %5 = arith.addf %2, %4 : vector<8x16xf32>
    %cst_5 = arith.constant 0.000000e+00 : f32
    %6 = vector.broadcast %cst_5 : f32 to vector<8x16xf32>
    %7 = arith.maximumf %5, %6 : vector<8x16xf32>
    %8 = arith.truncf %7 : vector<8x16xf32> to vector<8x16xbf16>
    %c0_6 = arith.constant 0 : index
    %c0_7 = arith.constant 0 : index
    %9 = vector.load %arg4[%c0_6, %c0_7] : memref<16x128xbf16, #tpu.memory_space<vmem>>, vector<16x128xbf16>
    %cst_8 = arith.constant dense<0.000000e+00> : vector<8x128xf32>
    %10 = tpu.matmul %8, %9, %cst_8 {dimension_numbers = #tpu.dot_dimension_numbers<[1], [0], [0], [1], [0, 0, 1, 1], [], []>} : vector<8x16xbf16>, vector<16x128xbf16>, vector<8x128xf32> -> vector<8x128xf32>
    %c0_9 = arith.constant 0 : index
    %c0_10 = arith.constant 0 : index
    %11 = vector.load %arg5[%c0_9, %c0_10] : memref<1x128xf32, #tpu.memory_space<vmem>>, vector<1x128xf32>
    %12 = vector.broadcast %11 : vector<1x128xf32> to vector<8x128xf32>
    %13 = arith.addf %10, %12 : vector<8x128xf32>
    %c0_11 = arith.constant 0 : index
    %c0_12 = arith.constant 0 : index
    %14 = vector.load %arg6[%c0_11, %c0_12] : memref<8x128xf32, #tpu.memory_space<vmem>>, vector<8x128xf32>
    %15 = arith.addf %13, %14 : vector<8x128xf32>
    %c0_13 = arith.constant 0 : index
    %c0_14 = arith.constant 0 : index
    %16 = vector.load %arg7[%c0_13, %c0_14] : memref<8x128xf32, #tpu.memory_space<vmem>>, vector<8x128xf32>
    tpu.vector_store %arg7[%c0_13, %c0_14], %15 {strides = array<i32>} : memref<8x128xf32, #tpu.memory_space<vmem>>, vector<8x128xf32>,
    return
  }
  func.func @transform_0(%arg0: i32) -> (i32, i32) {
    %c0_i32 = arith.constant 0 : i32
    %c0_i32_0 = arith.constant 0 : i32
    return %arg0, %c0_i32 : i32, i32
  }
  func.func @transform_1(%arg0: i32) -> (i32, i32) {
    %c0_i32 = arith.constant 0 : i32
    %c0_i32_0 = arith.constant 0 : i32
    %c0_i32_1 = arith.constant 0 : i32
    return %c0_i32, %c0_i32_0 : i32, i32
  }
  func.func @transform_2(%arg0: i32) -> (i32, i32) {
    %c0_i32 = arith.constant 0 : i32
    %c0_i32_0 = arith.constant 0 : i32
    %c0_i32_1 = arith.constant 0 : i32
    return %c0_i32, %c0_i32_0 : i32, i32
  }
  func.func @transform_3(%arg0: i32) -> (i32, i32) {
    %c0_i32 = arith.constant 0 : i32
    %c0_i32_0 = arith.constant 0 : i32
    %c0_i32_1 = arith.constant 0 : i32
    return %c0_i32, %c0_i32_0 : i32, i32
  }
  func.func @transform_4(%arg0: i32) -> (i32, i32) {
    %c0_i32 = arith.constant 0 : i32
    %c0_i32_0 = arith.constant 0 : i32
    %c0_i32_1 = arith.constant 0 : i32
    return %c0_i32, %c0_i32_0 : i32, i32
  }
  func.func @transform_5(%arg0: i32) -> (i32, i32) {
    %c0_i32 = arith.constant 0 : i32
    %c0_i32_0 = arith.constant 0 : i32
    return %arg0, %c0_i32 : i32, i32
  }
  func.func @transform_6(%arg0: i32) -> (i32, i32) {
    %c0_i32 = arith.constant 0 : i32
    %c0_i32_0 = arith.constant 0 : i32
    return %arg0, %c0_i32 : i32, i32
  }
}

module attributes {stable_mosaic.version = 11 : i64} {
  func.func @_matmul_bias_kernel(%arg0: i32, %arg1: i32, %arg2: memref<8x120xbf16, #tpu.memory_space<vmem>>, %arg3: memref<120x128xbf16, #tpu.memory_space<vmem>>, %arg4: memref<1x128xf32, #tpu.memory_space<vmem>>, %arg5: memref<8x128xf32, #tpu.memory_space<vmem>>) attributes {dimension_semantics = [#tpu.dimension_semantics<parallel>, #tpu.dimension_semantics<parallel>], iteration_bounds = array<i64: 1, 1>, scalar_prefetch = 0 : i64, scratch_operands = 0 : i64, tpu.core_type = #tpu.core_type<tc>, window_params = [{transform_indices = @transform_0, window_bounds = array<i64: 8, 120>}, {transform_indices = @transform_1, window_bounds = array<i64: 120, 128>}, {transform_indices = @transform_2, window_bounds = array<i64: 1, 128>}, {transform_indices = @transform_3, window_bounds = array<i64: 8, 128>}]} {
    %c0 = arith.constant 0 : index
    %c0_0 = arith.constant 0 : index
    %0 = vector.load %arg2[%c0, %c0_0] : memref<8x120xbf16, #tpu.memory_space<vmem>>, vector<8x120xbf16>
    %c0_1 = arith.constant 0 : index
    %c0_2 = arith.constant 0 : index
    %1 = vector.load %arg3[%c0_1, %c0_2] : memref<120x128xbf16, #tpu.memory_space<vmem>>, vector<120x128xbf16>
    %cst = arith.constant dense<0.000000e+00> : vector<8x128xf32>
    %2 = tpu.matmul %0, %1, %cst {dimension_numbers = #tpu.dot_dimension_numbers<[1], [0], [0], [1], [0, 0, 1, 1], [], []>} : vector<8x120xbf16>, vector<120x128xbf16>, vector<8x128xf32> -> vector<8x128xf32>
    %c0_3 = arith.constant 0 : index
    %c0_4 = arith.constant 0 : index
    %3 = vector.load %arg4[%c0_3, %c0_4] : memref<1x128xf32, #tpu.memory_space<vmem>>, vector<1x128xf32>
    %4 = vector.broadcast %3 : vector<1x128xf32> to vector<8x128xf32>
    %5 = arith.addf %2, %4 : vector<8x128xf32>
    %c0_5 = arith.constant 0 : index
    %c0_6 = arith.constant 0 : index
    %6 = vector.load %arg5[%c0_5, %c0_6] : memref<8x128xf32, #tpu.memory_space<vmem>>, vector<8x128xf32>
    tpu.vector_store %arg5[%c0_5, %c0_6], %5 {strides = array<i32>} : memref<8x128xf32, #tpu.memory_space<vmem>>, vector<8x128xf32>,
    return
  }
  func.func @transform_0(%arg0: i32, %arg1: i32) -> (i32, i32) {
    %c0_i32 = arith.constant 0 : i32
    %c0_i32_0 = arith.constant 0 : i32
    return %arg0, %c0_i32 : i32, i32
  }
  func.func @transform_1(%arg0: i32, %arg1: i32) -> (i32, i32) {
    %c0_i32 = arith.constant 0 : i32
    %c0_i32_0 = arith.constant 0 : i32
    return %c0_i32, %arg1 : i32, i32
  }
  func.func @transform_2(%arg0: i32, %arg1: i32) -> (i32, i32) {
    %c0_i32 = arith.constant 0 : i32
    %c0_i32_0 = arith.constant 0 : i32
    return %c0_i32, %arg1 : i32, i32
  }
  func.func @transform_3(%arg0: i32, %arg1: i32) -> (i32, i32) {
    %c0_i32 = arith.constant 0 : i32
    return %arg0, %arg1 : i32, i32
  }
}

module attributes {stable_mosaic.version = 11 : i64} {
  func.func @_vq_kernel(%arg0: i32, %arg1: memref<8x32xf32, #tpu.memory_space<vmem>>, %arg2: memref<64x32xf32, #tpu.memory_space<vmem>>, %arg3: memref<8x32xf32, #tpu.memory_space<vmem>>, %arg4: memref<1x1xf32, #tpu.memory_space<vmem>>, %arg5: memref<1x1xf32, #tpu.memory_space<vmem>>, %arg6: memref<1x64xf32, #tpu.memory_space<vmem>>, %arg7: memref<1x1xf32, #tpu.memory_space<vmem>>) attributes {dimension_semantics = [#tpu.dimension_semantics<arbitrary>], iteration_bounds = array<i64: 1>, scalar_prefetch = 0 : i64, scratch_operands = 2 : i64, tpu.core_type = #tpu.core_type<tc>, window_params = [{transform_indices = @transform_0, window_bounds = array<i64: 8, 32>}, {pipeline_mode = #tpu.pipeline_mode<synchronous>, transform_indices = @transform_1, window_bounds = array<i64: 64, 32>}, {transform_indices = @transform_2, window_bounds = array<i64: 8, 32>}, {pipeline_mode = #tpu.pipeline_mode<synchronous>, transform_indices = @transform_3, window_bounds = array<i64: 1, 1>}, {pipeline_mode = #tpu.pipeline_mode<synchronous>, transform_indices = @transform_4, window_bounds = array<i64: 1, 1>}]} {
    %c0_i32 = arith.constant 0 : i32
    %0 = arith.cmpi eq, %arg0, %c0_i32 : i32
    %1 = arith.extui %0 : i1 to i32
    %c0_i32_0 = arith.constant 0 : i32
    %2 = arith.cmpi ne, %1, %c0_i32_0 : i32
    scf.if %2 {
      %cst_25 = arith.constant 0.000000e+00 : f32
      %63 = vector.broadcast %cst_25 : f32 to vector<1x64xf32>
      %c0_26 = arith.constant 0 : index
      %c0_27 = arith.constant 0 : index
      %64 = vector.load %arg6[%c0_26, %c0_27] : memref<1x64xf32, #tpu.memory_space<vmem>>, vector<1x64xf32>
      tpu.vector_store %arg6[%c0_26, %c0_27], %63 {strides = array<i32>} : memref<1x64xf32, #tpu.memory_space<vmem>>, vector<1x64xf32>,
      %cst_28 = arith.constant 0.000000e+00 : f32
      %65 = vector.broadcast %cst_28 : f32 to vector<1x1xf32>
      %c0_29 = arith.constant 0 : index
      %c0_30 = arith.constant 0 : index
      %66 = vector.load %arg7[%c0_29, %c0_30] : memref<1x1xf32, #tpu.memory_space<vmem>>, vector<1x1xf32>
      tpu.vector_store %arg7[%c0_29, %c0_30], %65 {strides = array<i32>} : memref<1x1xf32, #tpu.memory_space<vmem>>, vector<1x1xf32>,
    } else {
    }
    %c0 = arith.constant 0 : index
    %c0_1 = arith.constant 0 : index
    %3 = vector.load %arg1[%c0, %c0_1] : memref<8x32xf32, #tpu.memory_space<vmem>>, vector<8x32xf32>
    %c0_2 = arith.constant 0 : index
    %c0_3 = arith.constant 0 : index
    %4 = vector.load %arg2[%c0_2, %c0_3] : memref<64x32xf32, #tpu.memory_space<vmem>>, vector<64x32xf32>
    %5 = arith.mulf %3, %3 : vector<8x32xf32>
    %cst = arith.constant dense<0.000000e+00> : vector<8xf32>
    %6 = vector.multi_reduction <add>, %5, %cst [1] : vector<8x32xf32> to vector<8xf32>
    %7 = vector.shape_cast %6 : vector<8xf32> to vector<8x1xf32>
    %8 = arith.mulf %4, %4 : vector<64x32xf32>
    %cst_4 = arith.constant dense<0.000000e+00> : vector<64xf32>
    %9 = vector.multi_reduction <add>, %8, %cst_4 [1] : vector<64x32xf32> to vector<64xf32>
    %10 = vector.shape_cast %9 : vector<64xf32> to vector<1x64xf32>
    %cst_5 = arith.constant dense<0.000000e+00> : vector<8x64xf32>
    %11 = tpu.matmul %3, %4, %cst_5 {dimension_numbers = #tpu.dot_dimension_numbers<[1], [1], [0], [0], [0, 0, 1, 0], [], []>} : vector<8x32xf32>, vector<64x32xf32>, vector<8x64xf32> -> vector<8x64xf32>
    %12 = vector.broadcast %7 : vector<8x1xf32> to vector<8x64xf32>
    %13 = vector.broadcast %10 : vector<1x64xf32> to vector<8x64xf32>
    %14 = arith.addf %12, %13 : vector<8x64xf32>
    %cst_6 = arith.constant 2.000000e+00 : f32
    %15 = vector.broadcast %cst_6 : f32 to vector<8x64xf32>
    %16 = arith.mulf %15, %11 : vector<8x64xf32>
    %17 = arith.subf %14, %16 : vector<8x64xf32>
    %cst_7 = arith.constant dense<0x7F800000> : vector<8xf32>
    %18 = vector.multi_reduction <minimumf>, %17, %cst_7 [1] : vector<8x64xf32> to vector<8xf32>
    %19 = vector.shape_cast %18 : vector<8xf32> to vector<8x1xf32>
    %20 = tpu.iota {dimensions = array<i32: 1>} : vector<8x64xi32>
    %21 = vector.broadcast %19 : vector<8x1xf32> to vector<8x64xf32>
    %22 = arith.cmpf ole, %17, %21 : vector<8x64xf32>
    %c64_i32 = arith.constant 64 : i32
    %23 = vector.broadcast %c64_i32 : i32 to vector<8x64xi32>
    %24 = arith.select %22, %20, %23 : vector<8x64xi1>, vector<8x64xi32>
    %cst_8 = arith.constant dense<2147483647> : vector<8xi32>
    %25 = vector.multi_reduction <minsi>, %24, %cst_8 [1] : vector<8x64xi32> to vector<8xi32>
    %26 = vector.shape_cast %25 : vector<8xi32> to vector<8x1xi32>
    %27 = vector.broadcast %26 : vector<8x1xi32> to vector<8x64xi32>
    %28 = arith.cmpi eq, %20, %27 : vector<8x64xi32>
    %29 = arith.extui %28 : vector<8x64xi1> to vector<8x64xi32>
    %30 = arith.sitofp %29 : vector<8x64xi32> to vector<8x64xf32>
    %cst_9 = arith.constant dense<0.000000e+00> : vector<8x32xf32>
    %31 = tpu.matmul %30, %4, %cst_9 {dimension_numbers = #tpu.dot_dimension_numbers<[1], [0], [0], [1], [0, 0, 1, 1], [], []>} : vector<8x64xf32>, vector<64x32xf32>, vector<8x32xf32> -> vector<8x32xf32>
    %c0_10 = arith.constant 0 : index
    %c0_11 = arith.constant 0 : index
    %32 = vector.load %arg3[%c0_10, %c0_11] : memref<8x32xf32, #tpu.memory_space<vmem>>, vector<8x32xf32>
    tpu.vector_store %arg3[%c0_10, %c0_11], %31 {strides = array<i32>} : memref<8x32xf32, #tpu.memory_space<vmem>>, vector<8x32xf32>,
    %33 = tpu.iota {dimensions = array<i32: 0>} : vector<8x1xi32>
    %c8_i32 = arith.constant 8 : i32
    %34 = arith.muli %arg0, %c8_i32 : i32
    %35 = vector.broadcast %34 : i32 to vector<8x1xi32>
    %36 = arith.addi %33, %35 : vector<8x1xi32>
    %c8_i32_12 = arith.constant 8 : i32
    %37 = vector.broadcast %c8_i32_12 : i32 to vector<8x1xi32>
    %38 = arith.cmpi slt, %36, %37 : vector<8x1xi32>
    %39 = arith.extui %38 : vector<8x1xi1> to vector<8x1xi32>
    %40 = arith.sitofp %39 : vector<8x1xi32> to vector<8x1xf32>
    %41 = arith.subf %31, %3 : vector<8x32xf32>
    %42 = vector.broadcast %40 : vector<8x1xf32> to vector<8x32xf32>
    %43 = arith.mulf %41, %42 : vector<8x32xf32>
    %c0_13 = arith.constant 0 : index
    %c0_14 = arith.constant 0 : index
    %44 = vector.load %arg7[%c0_13, %c0_14] : memref<1x1xf32, #tpu.memory_space<vmem>>, vector<1x1xf32>
    %45 = arith.mulf %43, %43 : vector<8x32xf32>
    %46 = vector.shape_cast %45 : vector<8x32xf32> to vector<1x8x32xf32>
    %cst_15 = arith.constant dense<0.000000e+00> : vector<1xf32>
    %47 = vector.multi_reduction <add>, %46, %cst_15 [1, 2] : vector<1x8x32xf32> to vector<1xf32>
    %48 = vector.shape_cast %47 : vector<1xf32> to vector<1x1x1xf32>
    %49 = vector.extract %48[0, 0, 0] : f32 from vector<1x1x1xf32>
    %50 = vector.broadcast %49 : f32 to vector<1x1xf32>
    %51 = arith.addf %44, %50 : vector<1x1xf32>
    %c0_16 = arith.constant 0 : index
    %c0_17 = arith.constant 0 : index
    %52 = vector.load %arg7[%c0_16, %c0_17] : memref<1x1xf32, #tpu.memory_space<vmem>>, vector<1x1xf32>
    tpu.vector_store %arg7[%c0_16, %c0_17], %51 {strides = array<i32>} : memref<1x1xf32, #tpu.memory_space<vmem>>, vector<1x1xf32>,
    %c0_18 = arith.constant 0 : index
    %c0_19 = arith.constant 0 : index
    %53 = vector.load %arg6[%c0_18, %c0_19] : memref<1x64xf32, #tpu.memory_space<vmem>>, vector<1x64xf32>
    %54 = vector.broadcast %40 : vector<8x1xf32> to vector<8x64xf32>
    %55 = arith.mulf %30, %54 : vector<8x64xf32>
    %cst_20 = arith.constant dense<0.000000e+00> : vector<64xf32>
    %56 = vector.multi_reduction <add>, %55, %cst_20 [0] : vector<8x64xf32> to vector<64xf32>
    %57 = vector.shape_cast %56 : vector<64xf32> to vector<1x64xf32>
    %58 = arith.addf %53, %57 : vector<1x64xf32>
    %c0_21 = arith.constant 0 : index
    %c0_22 = arith.constant 0 : index
    %59 = vector.load %arg6[%c0_21, %c0_22] : memref<1x64xf32, #tpu.memory_space<vmem>>, vector<1x64xf32>
    tpu.vector_store %arg6[%c0_21, %c0_22], %58 {strides = array<i32>} : memref<1x64xf32, #tpu.memory_space<vmem>>, vector<1x64xf32>,
    %c0_i32_23 = arith.constant 0 : i32
    %60 = arith.cmpi eq, %arg0, %c0_i32_23 : i32
    %61 = arith.extui %60 : i1 to i32
    %c0_i32_24 = arith.constant 0 : i32
    %62 = arith.cmpi ne, %61, %c0_i32_24 : i32
    scf.if %62 {
      %c0_25 = arith.constant 0 : index
      %c0_26 = arith.constant 0 : index
      %63 = vector.load %arg7[%c0_25, %c0_26] : memref<1x1xf32, #tpu.memory_space<vmem>>, vector<1x1xf32>
      %cst_27 = arith.constant 2.560000e+02 : f32
      %64 = vector.broadcast %cst_27 : f32 to vector<1x1xf32>
      %65 = arith.divf %63, %64 : vector<1x1xf32>
      %cst_28 = arith.constant 1.250000e+00 : f32
      %66 = vector.broadcast %cst_28 : f32 to vector<1x1xf32>
      %67 = arith.mulf %66, %65 : vector<1x1xf32>
      %c0_29 = arith.constant 0 : index
      %c0_30 = arith.constant 0 : index
      %68 = vector.load %arg4[%c0_29, %c0_30] : memref<1x1xf32, #tpu.memory_space<vmem>>, vector<1x1xf32>
      tpu.vector_store %arg4[%c0_29, %c0_30], %67 {strides = array<i32>} : memref<1x1xf32, #tpu.memory_space<vmem>>, vector<1x1xf32>,
      %c0_31 = arith.constant 0 : index
      %c0_32 = arith.constant 0 : index
      %69 = vector.load %arg6[%c0_31, %c0_32] : memref<1x64xf32, #tpu.memory_space<vmem>>, vector<1x64xf32>
      %cst_33 = arith.constant 8.000000e+00 : f32
      %70 = vector.broadcast %cst_33 : f32 to vector<1x64xf32>
      %71 = arith.divf %69, %70 : vector<1x64xf32>
      %cst_34 = arith.constant 1.000000e-10 : f32
      %72 = vector.broadcast %cst_34 : f32 to vector<1x64xf32>
      %73 = arith.addf %71, %72 : vector<1x64xf32>
      %74 = math.log %73 : vector<1x64xf32>
      %75 = arith.mulf %71, %74 : vector<1x64xf32>
      %cst_35 = arith.constant dense<0.000000e+00> : vector<1xf32>
      %76 = vector.multi_reduction <add>, %75, %cst_35 [1] : vector<1x64xf32> to vector<1xf32>
      %77 = vector.shape_cast %76 : vector<1xf32> to vector<1x1xf32>
      %cst_36 = arith.constant 0.000000e+00 : f32
      %78 = vector.broadcast %cst_36 : f32 to vector<1x1xf32>
      %79 = arith.subf %78, %77 : vector<1x1xf32>
      %80 = math.exp %79 : vector<1x1xf32>
      %c0_37 = arith.constant 0 : index
      %c0_38 = arith.constant 0 : index
      %81 = vector.load %arg5[%c0_37, %c0_38] : memref<1x1xf32, #tpu.memory_space<vmem>>, vector<1x1xf32>
      tpu.vector_store %arg5[%c0_37, %c0_38], %80 {strides = array<i32>} : memref<1x1xf32, #tpu.memory_space<vmem>>, vector<1x1xf32>,
    } else {
    }
    return
  }
  func.func @transform_0(%arg0: i32) -> (i32, i32) {
    %c0_i32 = arith.constant 0 : i32
    %c0_i32_0 = arith.constant 0 : i32
    return %arg0, %c0_i32 : i32, i32
  }
  func.func @transform_1(%arg0: i32) -> (i32, i32) {
    %c0_i32 = arith.constant 0 : i32
    %c0_i32_0 = arith.constant 0 : i32
    %c0_i32_1 = arith.constant 0 : i32
    return %c0_i32, %c0_i32_0 : i32, i32
  }
  func.func @transform_2(%arg0: i32) -> (i32, i32) {
    %c0_i32 = arith.constant 0 : i32
    %c0_i32_0 = arith.constant 0 : i32
    return %arg0, %c0_i32 : i32, i32
  }
  func.func @transform_3(%arg0: i32) -> (i32, i32) {
    %c0_i32 = arith.constant 0 : i32
    %c0_i32_0 = arith.constant 0 : i32
    %c0_i32_1 = arith.constant 0 : i32
    return %c0_i32, %c0_i32_0 : i32, i32
  }
  func.func @transform_4(%arg0: i32) -> (i32, i32) {
    %c0_i32 = arith.constant 0 : i32
    %c0_i32_0 = arith.constant 0 : i32
    %c0_i32_1 = arith.constant 0 : i32
    return %c0_i32, %c0_i32_0 : i32, i32
  }
}

module attributes {stable_mosaic.version = 11 : i64} {
  func.func @_matmul_bias_kernel(%arg0: i32, %arg1: i32, %arg2: memref<8x40xbf16, #tpu.memory_space<vmem>>, %arg3: memref<40x128xbf16, #tpu.memory_space<vmem>>, %arg4: memref<1x128xf32, #tpu.memory_space<vmem>>, %arg5: memref<8x128xf32, #tpu.memory_space<vmem>>) attributes {dimension_semantics = [#tpu.dimension_semantics<parallel>, #tpu.dimension_semantics<parallel>], iteration_bounds = array<i64: 1, 1>, scalar_prefetch = 0 : i64, scratch_operands = 0 : i64, tpu.core_type = #tpu.core_type<tc>, window_params = [{transform_indices = @transform_0, window_bounds = array<i64: 8, 40>}, {transform_indices = @transform_1, window_bounds = array<i64: 40, 128>}, {transform_indices = @transform_2, window_bounds = array<i64: 1, 128>}, {transform_indices = @transform_3, window_bounds = array<i64: 8, 128>}]} {
    %c0 = arith.constant 0 : index
    %c0_0 = arith.constant 0 : index
    %0 = vector.load %arg2[%c0, %c0_0] : memref<8x40xbf16, #tpu.memory_space<vmem>>, vector<8x40xbf16>
    %c0_1 = arith.constant 0 : index
    %c0_2 = arith.constant 0 : index
    %1 = vector.load %arg3[%c0_1, %c0_2] : memref<40x128xbf16, #tpu.memory_space<vmem>>, vector<40x128xbf16>
    %cst = arith.constant dense<0.000000e+00> : vector<8x128xf32>
    %2 = tpu.matmul %0, %1, %cst {dimension_numbers = #tpu.dot_dimension_numbers<[1], [0], [0], [1], [0, 0, 1, 1], [], []>} : vector<8x40xbf16>, vector<40x128xbf16>, vector<8x128xf32> -> vector<8x128xf32>
    %c0_3 = arith.constant 0 : index
    %c0_4 = arith.constant 0 : index
    %3 = vector.load %arg4[%c0_3, %c0_4] : memref<1x128xf32, #tpu.memory_space<vmem>>, vector<1x128xf32>
    %4 = vector.broadcast %3 : vector<1x128xf32> to vector<8x128xf32>
    %5 = arith.addf %2, %4 : vector<8x128xf32>
    %c0_5 = arith.constant 0 : index
    %c0_6 = arith.constant 0 : index
    %6 = vector.load %arg5[%c0_5, %c0_6] : memref<8x128xf32, #tpu.memory_space<vmem>>, vector<8x128xf32>
    tpu.vector_store %arg5[%c0_5, %c0_6], %5 {strides = array<i32>} : memref<8x128xf32, #tpu.memory_space<vmem>>, vector<8x128xf32>,
    return
  }
  func.func @transform_0(%arg0: i32, %arg1: i32) -> (i32, i32) {
    %c0_i32 = arith.constant 0 : i32
    %c0_i32_0 = arith.constant 0 : i32
    return %arg0, %c0_i32 : i32, i32
  }
  func.func @transform_1(%arg0: i32, %arg1: i32) -> (i32, i32) {
    %c0_i32 = arith.constant 0 : i32
    %c0_i32_0 = arith.constant 0 : i32
    return %c0_i32, %arg1 : i32, i32
  }
  func.func @transform_2(%arg0: i32, %arg1: i32) -> (i32, i32) {
    %c0_i32 = arith.constant 0 : i32
    %c0_i32_0 = arith.constant 0 : i32
    return %c0_i32, %arg1 : i32, i32
  }
  func.func @transform_3(%arg0: i32, %arg1: i32) -> (i32, i32) {
    %c0_i32 = arith.constant 0 : i32
    return %arg0, %arg1 : i32, i32
  }
}

module attributes {stable_mosaic.version = 11 : i64} {
  func.func @_matmul_bias_kernel(%arg0: i32, %arg1: i32, %arg2: memref<16x80xbf16, #tpu.memory_space<vmem>>, %arg3: memref<80x128xbf16, #tpu.memory_space<vmem>>, %arg4: memref<1x128xf32, #tpu.memory_space<vmem>>, %arg5: memref<16x128xf32, #tpu.memory_space<vmem>>) attributes {dimension_semantics = [#tpu.dimension_semantics<parallel>, #tpu.dimension_semantics<parallel>], iteration_bounds = array<i64: 1, 1>, scalar_prefetch = 0 : i64, scratch_operands = 0 : i64, tpu.core_type = #tpu.core_type<tc>, window_params = [{transform_indices = @transform_0, window_bounds = array<i64: 16, 80>}, {transform_indices = @transform_1, window_bounds = array<i64: 80, 128>}, {transform_indices = @transform_2, window_bounds = array<i64: 1, 128>}, {transform_indices = @transform_3, window_bounds = array<i64: 16, 128>}]} {
    %c0 = arith.constant 0 : index
    %c0_0 = arith.constant 0 : index
    %0 = vector.load %arg2[%c0, %c0_0] : memref<16x80xbf16, #tpu.memory_space<vmem>>, vector<16x80xbf16>
    %c0_1 = arith.constant 0 : index
    %c0_2 = arith.constant 0 : index
    %1 = vector.load %arg3[%c0_1, %c0_2] : memref<80x128xbf16, #tpu.memory_space<vmem>>, vector<80x128xbf16>
    %cst = arith.constant dense<0.000000e+00> : vector<16x128xf32>
    %2 = tpu.matmul %0, %1, %cst {dimension_numbers = #tpu.dot_dimension_numbers<[1], [0], [0], [1], [0, 0, 1, 1], [], []>} : vector<16x80xbf16>, vector<80x128xbf16>, vector<16x128xf32> -> vector<16x128xf32>
    %c0_3 = arith.constant 0 : index
    %c0_4 = arith.constant 0 : index
    %3 = vector.load %arg4[%c0_3, %c0_4] : memref<1x128xf32, #tpu.memory_space<vmem>>, vector<1x128xf32>
    %4 = vector.broadcast %3 : vector<1x128xf32> to vector<16x128xf32>
    %5 = arith.addf %2, %4 : vector<16x128xf32>
    %cst_5 = arith.constant 0.000000e+00 : f32
    %6 = vector.broadcast %cst_5 : f32 to vector<16x128xf32>
    %7 = arith.maximumf %5, %6 : vector<16x128xf32>
    %c0_6 = arith.constant 0 : index
    %c0_7 = arith.constant 0 : index
    %8 = vector.load %arg5[%c0_6, %c0_7] : memref<16x128xf32, #tpu.memory_space<vmem>>, vector<16x128xf32>
    tpu.vector_store %arg5[%c0_6, %c0_7], %7 {strides = array<i32>} : memref<16x128xf32, #tpu.memory_space<vmem>>, vector<16x128xf32>,
    return
  }
  func.func @transform_0(%arg0: i32, %arg1: i32) -> (i32, i32) {
    %c0_i32 = arith.constant 0 : i32
    %c0_i32_0 = arith.constant 0 : i32
    return %arg0, %c0_i32 : i32, i32
  }
  func.func @transform_1(%arg0: i32, %arg1: i32) -> (i32, i32) {
    %c0_i32 = arith.constant 0 : i32
    %c0_i32_0 = arith.constant 0 : i32
    return %c0_i32, %arg1 : i32, i32
  }
  func.func @transform_2(%arg0: i32, %arg1: i32) -> (i32, i32) {
    %c0_i32 = arith.constant 0 : i32
    %c0_i32_0 = arith.constant 0 : i32
    return %c0_i32, %arg1 : i32, i32
  }
  func.func @transform_3(%arg0: i32, %arg1: i32) -> (i32, i32) {
    %c0_i32 = arith.constant 0 : i32
    return %arg0, %arg1 : i32, i32
  }
}

module attributes {stable_mosaic.version = 11 : i64} {
  func.func @_matmul_bias_kernel(%arg0: i32, %arg1: i32, %arg2: memref<24x40xbf16, #tpu.memory_space<vmem>>, %arg3: memref<40x512xbf16, #tpu.memory_space<vmem>>, %arg4: memref<1x512xf32, #tpu.memory_space<vmem>>, %arg5: memref<24x512xf32, #tpu.memory_space<vmem>>) attributes {dimension_semantics = [#tpu.dimension_semantics<parallel>, #tpu.dimension_semantics<parallel>], iteration_bounds = array<i64: 1, 5>, scalar_prefetch = 0 : i64, scratch_operands = 0 : i64, tpu.core_type = #tpu.core_type<tc>, window_params = [{transform_indices = @transform_0, window_bounds = array<i64: 24, 40>}, {transform_indices = @transform_1, window_bounds = array<i64: 40, 512>}, {transform_indices = @transform_2, window_bounds = array<i64: 1, 512>}, {transform_indices = @transform_3, window_bounds = array<i64: 24, 512>}]} {
    %c0 = arith.constant 0 : index
    %c0_0 = arith.constant 0 : index
    %0 = vector.load %arg2[%c0, %c0_0] : memref<24x40xbf16, #tpu.memory_space<vmem>>, vector<24x40xbf16>
    %c0_1 = arith.constant 0 : index
    %c0_2 = arith.constant 0 : index
    %1 = vector.load %arg3[%c0_1, %c0_2] : memref<40x512xbf16, #tpu.memory_space<vmem>>, vector<40x512xbf16>
    %cst = arith.constant dense<0.000000e+00> : vector<24x512xf32>
    %2 = tpu.matmul %0, %1, %cst {dimension_numbers = #tpu.dot_dimension_numbers<[1], [0], [0], [1], [0, 0, 1, 1], [], []>} : vector<24x40xbf16>, vector<40x512xbf16>, vector<24x512xf32> -> vector<24x512xf32>
    %c0_3 = arith.constant 0 : index
    %c0_4 = arith.constant 0 : index
    %3 = vector.load %arg4[%c0_3, %c0_4] : memref<1x512xf32, #tpu.memory_space<vmem>>, vector<1x512xf32>
    %4 = vector.broadcast %3 : vector<1x512xf32> to vector<24x512xf32>
    %5 = arith.addf %2, %4 : vector<24x512xf32>
    %c0_5 = arith.constant 0 : index
    %c0_6 = arith.constant 0 : index
    %6 = vector.load %arg5[%c0_5, %c0_6] : memref<24x512xf32, #tpu.memory_space<vmem>>, vector<24x512xf32>
    tpu.vector_store %arg5[%c0_5, %c0_6], %5 {strides = array<i32>} : memref<24x512xf32, #tpu.memory_space<vmem>>, vector<24x512xf32>,
    return
  }
  func.func @transform_0(%arg0: i32, %arg1: i32) -> (i32, i32) {
    %c0_i32 = arith.constant 0 : i32
    %c0_i32_0 = arith.constant 0 : i32
    return %arg0, %c0_i32 : i32, i32
  }
  func.func @transform_1(%arg0: i32, %arg1: i32) -> (i32, i32) {
    %c0_i32 = arith.constant 0 : i32
    %c0_i32_0 = arith.constant 0 : i32
    return %c0_i32, %arg1 : i32, i32
  }
  func.func @transform_2(%arg0: i32, %arg1: i32) -> (i32, i32) {
    %c0_i32 = arith.constant 0 : i32
    %c0_i32_0 = arith.constant 0 : i32
    return %c0_i32, %arg1 : i32, i32
  }
  func.func @transform_3(%arg0: i32, %arg1: i32) -> (i32, i32) {
    %c0_i32 = arith.constant 0 : i32
    return %arg0, %arg1 : i32, i32
  }
}

</mosaic_0001>

<llo_original>
// kernel: model_forward.12
$region0: #{model_forward.12}
  #allocation0 [shape = 'u32[]', space=smem, size = 0x4, offset = 0x4, fixed_abs, tag = 'smem constant byte address 0x4 - core index']
  #allocation1 [shape = 'u32[72,128]{1,0:T(1,128)}', space=vmem, size = 0x9000, scoped, tag = 'internal scratch']
  %s0 = inlined_call_operand.vmem [shape: bf16[16,4], index: 0, kind: input, shape index: {}]
  %s1 = inlined_call_operand.vmem [shape: bf16[4,128], index: 1, kind: input, shape index: {}]
  %s2 = inlined_call_operand.vmem [shape: f32[1,128], index: 2, kind: input, shape index: {}]
  %s3 = inlined_call_operand.vmem [shape: f32[16,128], index: 3, kind: output, shape index: {}]
  %s4 = sld [smem:[#allocation0]]
  $region22: #{model_forward.12} parent=0
    _
  %s6 = ssub.s32 1, %s4
  %s7 = scalar_select 0, %s6, %s4
  // Predicated region
  $region2: #{model_forward.12} parent=0 // pred_check
    _
  $region3: #{model_forward.12} parent=0 // pred_check_branch
    %9 = sbr.rel (0) target = $region5
  $region4: #{model_forward.12} parent=0 // pred_region
    _
  $region5: #{model_forward.12} parent=0 // pred_fallthru
    _
  // Predicated region
  $region6: #{model_forward.12} parent=0 // pred_check
    _
  $region7: #{model_forward.12} parent=0 // pred_check_branch
    %11 = sbr.rel (0) target = $region9
  $region8: #{model_forward.12} parent=0 // pred_region
    _
  $region9: #{model_forward.12} parent=0 // pred_fallthru
    _
  // Predicated region
  $region10: #{model_forward.12} parent=0 // pred_check
    _
  $region11: #{model_forward.12} parent=0 // pred_check_branch
    %13 = sbr.rel (0) target = $region13
  $region12: #{model_forward.12} parent=0 // pred_region
    _
  $region13: #{model_forward.12} parent=0 // pred_fallthru
    _
  %v15 = vld [vmem:[%s0] sm:$0xf]
  %v16 = vld [vmem:[%s0 + $0x4] sm:$0xf]
  %v17 = vld [vmem:[%s1] sm:$0x3]
  %v18 = vld [vmem:[%s2] sm:$0x1]
  %v20 = vperm.slane %v18, 0
  %v24 = vunpack.c.l.b16 %v15
  %v25 = vunpack.c.l.b16 %v16
  %v26 = vpack.c.b16 %v25, %v24
  %vm27 = vcmask 31744
  %v29 = vsel %vm27, %v26, 0
  %vm31 = vcmask 1041408
  %v33 = vsel %vm31, %v17, 0
  %35 = vmatpush.bf16.msra.mxu0 0
  %36 = vmatpush.bf16.msra.mxu0 0
  %37 = vmatpush.bf16.msra.mxu0 0
  %38 = vmatpush.bf16.msra.mxu0 0
  %39 = vmatpush.bf16.msra.mxu0 0
  %40 = vmatpush.bf16.msra.mxu0 0
  %41 = vmatpush.bf16.msra.mxu0 0
  %42 = vmatpush.bf16.msra.mxu0 %v33
  %43 = vmatmul.bf16.gmra.mxu0 %v29
  %v44 = vpop.f32.mrf.mxu0
  %v45 = vadd.f32 %v20, %v44
  %v46 = vpop.f32.mrf.mxu0
  %v47 = vadd.f32 %v20, %v46
  %48 = vdwg.mxu0
  %v49 = vmax.f32 %v45, 0.0
  %v50 = vmax.f32 %v47, 0.0
  %51 = vst [vmem:[%s3] sm:$0xff] %v49
  %52 = vst [vmem:[%s3 + $0x8] sm:$0xff] %v50
  // Predicated region
  $region14: #{model_forward.12} parent=0 // pred_check
    _
  $region15: #{model_forward.12} parent=0 // pred_check_branch
    %54 = sbr.rel (0) target = $region17
  $region16: #{model_forward.12} parent=0 // pred_region
    _
  $region17: #{model_forward.12} parent=0 // pred_fallthru
    _
  // Predicated region
  $region18: #{model_forward.12} parent=0 // pred_check
    _
  $region19: #{model_forward.12} parent=0 // pred_check_branch
    %56 = sbr.rel (0) target = $region21
  $region20: #{model_forward.12} parent=0 // pred_region
    _
  $region21: #{model_forward.12} parent=0 // pred_fallthru
    _

// kernel: model_forward.13
$region0: #{model_forward.13}
  #allocation0 [shape = 'u32[]', space=smem, size = 0x4, offset = 0x4, fixed_abs, tag = 'smem constant byte address 0x4 - core index']
  #allocation1 [shape = 'u32[72,128]{1,0:T(1,128)}', space=vmem, size = 0x9000, scoped, tag = 'internal scratch']
  %s0 = inlined_call_operand.vmem [shape: bf16[8,80], index: 0, kind: input, shape index: {}]
  %s1 = inlined_call_operand.vmem [shape: bf16[80,128], index: 1, kind: input, shape index: {}]
  %s2 = inlined_call_operand.vmem [shape: f32[1,128], index: 2, kind: input, shape index: {}]
  %s3 = inlined_call_operand.vmem [shape: f32[8,128], index: 3, kind: output, shape index: {}]
  %s4 = sld [smem:[#allocation0]]
  $region22: #{model_forward.13} parent=0
    _
  %s6 = ssub.s32 1, %s4
  %s7 = scalar_select 0, %s6, %s4
  // Predicated region
  $region2: #{model_forward.13} parent=0 // pred_check
    _
  $region3: #{model_forward.13} parent=0 // pred_check_branch
    %9 = sbr.rel (0) target = $region5
  $region4: #{model_forward.13} parent=0 // pred_region
    _
  $region5: #{model_forward.13} parent=0 // pred_fallthru
    _
  // Predicated region
  $region6: #{model_forward.13} parent=0 // pred_check
    _
  $region7: #{model_forward.13} parent=0 // pred_check_branch
    %11 = sbr.rel (0) target = $region9
  $region8: #{model_forward.13} parent=0 // pred_region
    _
  $region9: #{model_forward.13} parent=0 // pred_fallthru
    _
  // Predicated region
  $region10: #{model_forward.13} parent=0 // pred_check
    _
  $region11: #{model_forward.13} parent=0 // pred_check_branch
    %13 = sbr.rel (0) target = $region13
  $region12: #{model_forward.13} parent=0 // pred_region
    _
  $region13: #{model_forward.13} parent=0 // pred_fallthru
    _
  %v15 = vld [vmem:[%s0] sm:$0xf]
  %v16 = vld [vmem:[%s1] sm:$0xf]
  %v17 = vld [vmem:[%s1 + $0x4] sm:$0xf]
  %v18 = vld [vmem:[%s1 + $0x8] sm:$0xf]
  %v19 = vld [vmem:[%s1 + $0xc] sm:$0xf]
  %v20 = vld [vmem:[%s1 + $0x10] sm:$0xf]
  %v21 = vld [vmem:[%s1 + $0x14] sm:$0xf]
  %v22 = vld [vmem:[%s1 + $0x18] sm:$0xf]
  %v23 = vld [vmem:[%s1 + $0x1c] sm:$0xf]
  %v24 = vld [vmem:[%s1 + $0x20] sm:$0xf]
  %v25 = vld [vmem:[%s1 + $0x24] sm:$0xf]
  %v26 = vld [vmem:[%s2] sm:$0x1]
  %v28 = vperm.slane %v26, 0
  %v40 = vunpack.c.l.b16 %v16
  %v41 = vunpack.c.l.b16 %v17
  %v42 = vunpack.c.l.b16 %v18
  %v43 = vunpack.c.l.b16 %v19
  %v44 = vunpack.c.l.b16 %v20
  %v45 = vunpack.c.l.b16 %v21
  %v46 = vunpack.c.l.b16 %v22
  %v47 = vunpack.c.l.b16 %v23
  %v48 = vunpack.c.l.b16 %v24
  %v49 = vunpack.c.l.b16 %v25
  %v50 = vpack.c.b16 %v41, %v40
  %v51 = vpack.c.b16 %v43, %v42
  %v52 = vpack.c.b16 %v45, %v44
  %v53 = vpack.c.b16 %v47, %v46
  %v54 = vpack.c.b16 %v49, %v48
  %vm60 = vcmask 654336
  %v62 = vsel %vm60, %v15, 0
  %64 = vmatpush.bf16.msra.mxu0 0
  %65 = vmatpush.bf16.msra.mxu0 0
  %66 = vmatpush.bf16.msra.mxu0 0
  %67 = vmatpush.bf16.msra.mxu0 %v54
  %68 = vmatpush.bf16.msra.mxu0 %v53
  %69 = vmatpush.bf16.msra.mxu0 %v52
  %70 = vmatpush.bf16.msra.mxu0 %v51
  %71 = vmatpush.bf16.msra.mxu0 %v50
  %72 = vmatmul.bf16.gmra.mxu0 %v62
  %v73 = vpop.f32.mrf.mxu0
  %v74 = vadd.f32 %v28, %v73
  %v75 = vpop.f32.mrf.mxu0
  %76 = vdwg.mxu0
  %v77 = vmax.f32 %v74, 0.0
  %78 = vst [vmem:[%s3] sm:$0xff] %v77
  // Predicated region
  $region14: #{model_forward.13} parent=0 // pred_check
    _
  $region15: #{model_forward.13} parent=0 // pred_check_branch
    %80 = sbr.rel (0) target = $region17
  $region16: #{model_forward.13} parent=0 // pred_region
    _
  $region17: #{model_forward.13} parent=0 // pred_fallthru
    _
  // Predicated region
  $region18: #{model_forward.13} parent=0 // pred_check
    _
  $region19: #{model_forward.13} parent=0 // pred_check_branch
    %82 = sbr.rel (0) target = $region21
  $region20: #{model_forward.13} parent=0 // pred_region
    _
  $region21: #{model_forward.13} parent=0 // pred_fallthru
    _

// kernel: model_forward.15
$region0: #{model_forward.15}
  #allocation0 [shape = 'u32[]', space=smem, size = 0x4, offset = 0x4, fixed_abs, tag = 'smem constant byte address 0x4 - core index']
  #allocation1 [shape = 'u32[72,128]{1,0:T(1,128)}', space=vmem, size = 0x9000, scoped, tag = 'internal scratch']
  %s0 = inlined_call_operand.vmem [shape: bf16[8,120], index: 0, kind: input, shape index: {}]
  %s1 = inlined_call_operand.vmem [shape: bf16[120,16], index: 1, kind: input, shape index: {}]
  %s2 = inlined_call_operand.vmem [shape: f32[1,16], index: 2, kind: input, shape index: {}]
  %s3 = inlined_call_operand.vmem [shape: bf16[16,128], index: 3, kind: input, shape index: {}]
  %s4 = inlined_call_operand.vmem [shape: f32[1,128], index: 4, kind: input, shape index: {}]
  %s5 = inlined_call_operand.vmem [shape: f32[8,128], index: 5, kind: input, shape index: {}]
  %s6 = inlined_call_operand.vmem [shape: f32[8,128], index: 6, kind: output, shape index: {}]
  %s7 = sld [smem:[#allocation0]]
  $region34: #{model_forward.15} parent=0
    _
  %s9 = ssub.s32 1, %s7
  %s10 = scalar_select 0, %s9, %s7
  // Predicated region
  $region2: #{model_forward.15} parent=0 // pred_check
    _
  $region3: #{model_forward.15} parent=0 // pred_check_branch
    %12 = sbr.rel (0) target = $region5
  $region4: #{model_forward.15} parent=0 // pred_region
    _
  $region5: #{model_forward.15} parent=0 // pred_fallthru
    _
  // Predicated region
  $region6: #{model_forward.15} parent=0 // pred_check
    _
  $region7: #{model_forward.15} parent=0 // pred_check_branch
    %14 = sbr.rel (0) target = $region9
  $region8: #{model_forward.15} parent=0 // pred_region
    _
  $region9: #{model_forward.15} parent=0 // pred_fallthru
    _
  // Predicated region
  $region10: #{model_forward.15} parent=0 // pred_check
    _
  $region11: #{model_forward.15} parent=0 // pred_check_branch
    %16 = sbr.rel (0) target = $region13
  $region12: #{model_forward.15} parent=0 // pred_region
    _
  $region13: #{model_forward.15} parent=0 // pred_fallthru
    _
  // Predicated region
  $region14: #{model_forward.15} parent=0 // pred_check
    _
  $region15: #{model_forward.15} parent=0 // pred_check_branch
    %18 = sbr.rel (0) target = $region17
  $region16: #{model_forward.15} parent=0 // pred_region
    _
  $region17: #{model_forward.15} parent=0 // pred_fallthru
    _
  // Predicated region
  $region18: #{model_forward.15} parent=0 // pred_check
    _
  $region19: #{model_forward.15} parent=0 // pred_check_branch
    %20 = sbr.rel (0) target = $region21
  $region20: #{model_forward.15} parent=0 // pred_region
    _
  $region21: #{model_forward.15} parent=0 // pred_fallthru
    _
  // Predicated region
  $region22: #{model_forward.15} parent=0 // pred_check
    _
  $region23: #{model_forward.15} parent=0 // pred_check_branch
    %22 = sbr.rel (0) target = $region25
  $region24: #{model_forward.15} parent=0 // pred_region
    _
  $region25: #{model_forward.15} parent=0 // pred_fallthru
    _
  %v24 = vld [vmem:[%s0] sm:$0xf]
  %v25 = vld [vmem:[%s1] sm:$0xf]
  %v26 = vld [vmem:[%s1 + $0x4] sm:$0xf]
  %v27 = vld [vmem:[%s1 + $0x8] sm:$0xf]
  %v28 = vld [vmem:[%s1 + $0xc] sm:$0xf]
  %v29 = vld [vmem:[%s1 + $0x10] sm:$0xf]
  %v30 = vld [vmem:[%s1 + $0x14] sm:$0xf]
  %v31 = vld [vmem:[%s1 + $0x18] sm:$0xf]
  %v32 = vld [vmem:[%s1 + $0x1c] sm:$0xf]
  %v33 = vld [vmem:[%s1 + $0x20] sm:$0xf]
  %v34 = vld [vmem:[%s1 + $0x24] sm:$0xf]
  %v35 = vld [vmem:[%s1 + $0x28] sm:$0xf]
  %v36 = vld [vmem:[%s1 + $0x2c] sm:$0xf]
  %v37 = vld [vmem:[%s1 + $0x30] sm:$0xf]
  %v38 = vld [vmem:[%s1 + $0x34] sm:$0xf]
  %v39 = vld [vmem:[%s1 + $0x38] sm:$0xf]
  %v40 = vld [vmem:[%s2] sm:$0x1]
  %v42 = vperm.slane %v40, 0
  %v59 = vunpack.c.l.b16 %v25
  %v60 = vunpack.c.l.b16 %v26
  %v61 = vunpack.c.l.b16 %v27
  %v62 = vunpack.c.l.b16 %v28
  %v63 = vunpack.c.l.b16 %v29
  %v64 = vunpack.c.l.b16 %v30
  %v65 = vunpack.c.l.b16 %v31
  %v66 = vunpack.c.l.b16 %v32
  %v67 = vunpack.c.l.b16 %v33
  %v68 = vunpack.c.l.b16 %v34
  %v69 = vunpack.c.l.b16 %v35
  %v70 = vunpack.c.l.b16 %v36
  %v71 = vunpack.c.l.b16 %v37
  %v72 = vunpack.c.l.b16 %v38
  %v73 = vunpack.c.l.b16 %v39
  %v74 = vpack.c.b16 %v60, %v59
  %v75 = vpack.c.b16 %v62, %v61
  %v76 = vpack.c.b16 %v64, %v63
  %v77 = vpack.c.b16 %v66, %v65
  %v78 = vpack.c.b16 %v68, %v67
  %v79 = vpack.c.b16 %v70, %v69
  %v80 = vpack.c.b16 %v72, %v71
  %v81 = vpack.c.b16 %v73, %v73
  %vm89 = vcmask 982016
  %v91 = vsel %vm89, %v24, 0
  %vm93 = vcmask 1043456
  %v95 = vsel %vm93, %v81, 0
  %97 = vmatpush.bf16.msra.mxu0 %v95
  %98 = vmatpush.bf16.msra.mxu0 %v80
  %99 = vmatpush.bf16.msra.mxu0 %v79
  %100 = vmatpush.bf16.msra.mxu0 %v78
  %101 = vmatpush.bf16.msra.mxu0 %v77
  %102 = vmatpush.bf16.msra.mxu0 %v76
  %103 = vmatpush.bf16.msra.mxu0 %v75
  %104 = vmatpush.bf16.msra.mxu0 %v74
  %105 = vmatmul.bf16.gmra.mxu0 %v91
  %v106 = vpop.f32.mrf.mxu0
  %v107 = vadd.f32 %v42, %v106
  %v108 = vpop.f32.mrf.mxu0
  %109 = vdwg.mxu0
  %v110 = vmax.f32 %v107, 0.0
  %v111 = vpack.c.bf16 %v110, %v110
  %v112 = vld [vmem:[%s3] sm:$0xf]
  %v113 = vld [vmem:[%s3 + $0x4] sm:$0xf]
  %v114 = vld [vmem:[%s4] sm:$0x1]
  %v116 = vperm.slane %v114, 0
  %v120 = vunpack.c.l.b16 %v112
  %v121 = vunpack.c.l.b16 %v113
  %v122 = vpack.c.b16 %v121, %v120
  %vm124 = vcmask 130048
  %v126 = vsel %vm124, %v111, 0
  %128 = vmatpush.bf16.msra.mxu0 0
  %129 = vmatpush.bf16.msra.mxu0 0
  %130 = vmatpush.bf16.msra.mxu0 0
  %131 = vmatpush.bf16.msra.mxu0 0
  %132 = vmatpush.bf16.msra.mxu0 0
  %133 = vmatpush.bf16.msra.mxu0 0
  %134 = vmatpush.bf16.msra.mxu0 0
  %135 = vmatpush.bf16.msra.mxu0 %v122
  %136 = vmatmul.bf16.gmra.mxu0 %v126
  %v137 = vpop.f32.mrf.mxu0
  %v138 = vadd.f32 %v116, %v137
  %v139 = vpop.f32.mrf.mxu0
  %140 = vdwg.mxu0
  %v141 = vld [vmem:[%s5] sm:$0xff]
  %v142 = vadd.f32 %v138, %v141
  %143 = vst [vmem:[%s6] sm:$0xff] %v142
  // Predicated region
  $region26: #{model_forward.15} parent=0 // pred_check
    _
  $region27: #{model_forward.15} parent=0 // pred_check_branch
    %145 = sbr.rel (0) target = $region29
  $region28: #{model_forward.15} parent=0 // pred_region
    _
  $region29: #{model_forward.15} parent=0 // pred_fallthru
    _
  // Predicated region
  $region30: #{model_forward.15} parent=0 // pred_check
    _
  $region31: #{model_forward.15} parent=0 // pred_check_branch
    %147 = sbr.rel (0) target = $region33
  $region32: #{model_forward.15} parent=0 // pred_region
    _
  $region33: #{model_forward.15} parent=0 // pred_fallthru
    _

// kernel: model_forward.14
$region0: #{model_forward.14}
  #allocation0 [shape = 'u32[]', space=smem, size = 0x4, offset = 0x4, fixed_abs, tag = 'smem constant byte address 0x4 - core index']
  #allocation1 [shape = 'u32[72,128]{1,0:T(1,128)}', space=vmem, size = 0x9000, scoped, tag = 'internal scratch']
  %s0 = inlined_call_operand.vmem [shape: bf16[8,120], index: 0, kind: input, shape index: {}]
  %s1 = inlined_call_operand.vmem [shape: bf16[120,128], index: 1, kind: input, shape index: {}]
  %s2 = inlined_call_operand.vmem [shape: f32[1,128], index: 2, kind: input, shape index: {}]
  %s3 = inlined_call_operand.vmem [shape: f32[8,128], index: 3, kind: output, shape index: {}]
  %s4 = sld [smem:[#allocation0]]
  $region22: #{model_forward.14} parent=0
    _
  %s6 = ssub.s32 1, %s4
  %s7 = scalar_select 0, %s6, %s4
  // Predicated region
  $region2: #{model_forward.14} parent=0 // pred_check
    _
  $region3: #{model_forward.14} parent=0 // pred_check_branch
    %9 = sbr.rel (0) target = $region5
  $region4: #{model_forward.14} parent=0 // pred_region
    _
  $region5: #{model_forward.14} parent=0 // pred_fallthru
    _
  // Predicated region
  $region6: #{model_forward.14} parent=0 // pred_check
    _
  $region7: #{model_forward.14} parent=0 // pred_check_branch
    %11 = sbr.rel (0) target = $region9
  $region8: #{model_forward.14} parent=0 // pred_region
    _
  $region9: #{model_forward.14} parent=0 // pred_fallthru
    _
  // Predicated region
  $region10: #{model_forward.14} parent=0 // pred_check
    _
  $region11: #{model_forward.14} parent=0 // pred_check_branch
    %13 = sbr.rel (0) target = $region13
  $region12: #{model_forward.14} parent=0 // pred_region
    _
  $region13: #{model_forward.14} parent=0 // pred_fallthru
    _
  %v14 = vld [vmem:[%s0] sm:$0xf]
  %v15 = vld [vmem:[%s1] sm:$0xf]
  %v16 = vld [vmem:[%s1 + $0x4] sm:$0xf]
  %v17 = vld [vmem:[%s1 + $0x8] sm:$0xf]
  %v18 = vld [vmem:[%s1 + $0xc] sm:$0xf]
  %v19 = vld [vmem:[%s1 + $0x10] sm:$0xf]
  %v20 = vld [vmem:[%s1 + $0x14] sm:$0xf]
  %v21 = vld [vmem:[%s1 + $0x18] sm:$0xf]
  %v22 = vld [vmem:[%s1 + $0x1c] sm:$0xf]
  %v23 = vld [vmem:[%s1 + $0x20] sm:$0xf]
  %v24 = vld [vmem:[%s1 + $0x24] sm:$0xf]
  %v25 = vld [vmem:[%s1 + $0x28] sm:$0xf]
  %v26 = vld [vmem:[%s1 + $0x2c] sm:$0xf]
  %v27 = vld [vmem:[%s1 + $0x30] sm:$0xf]
  %v28 = vld [vmem:[%s1 + $0x34] sm:$0xf]
  %v29 = vld [vmem:[%s1 + $0x38] sm:$0xf]
  %v30 = vld [vmem:[%s2] sm:$0x1]
  %v32 = vperm.slane %v30, 0
  %v49 = vunpack.c.l.b16 %v15
  %v50 = vunpack.c.l.b16 %v16
  %v51 = vunpack.c.l.b16 %v17
  %v52 = vunpack.c.l.b16 %v18
  %v53 = vunpack.c.l.b16 %v19
  %v54 = vunpack.c.l.b16 %v20
  %v55 = vunpack.c.l.b16 %v21
  %v56 = vunpack.c.l.b16 %v22
  %v57 = vunpack.c.l.b16 %v23
  %v58 = vunpack.c.l.b16 %v24
  %v59 = vunpack.c.l.b16 %v25
  %v60 = vunpack.c.l.b16 %v26
  %v61 = vunpack.c.l.b16 %v27
  %v62 = vunpack.c.l.b16 %v28
  %v63 = vunpack.c.l.b16 %v29
  %v64 = vpack.c.b16 %v50, %v49
  %v65 = vpack.c.b16 %v52, %v51
  %v66 = vpack.c.b16 %v54, %v53
  %v67 = vpack.c.b16 %v56, %v55
  %v68 = vpack.c.b16 %v58, %v57
  %v69 = vpack.c.b16 %v60, %v59
  %v70 = vpack.c.b16 %v62, %v61
  %v71 = vpack.c.b16 %v63, %v63
  %vm79 = vcmask 982016
  %v81 = vsel %vm79, %v14, 0
  %vm83 = vcmask 1043456
  %v85 = vsel %vm83, %v71, 0
  %87 = vmatpush.bf16.msra.mxu0 %v85
  %88 = vmatpush.bf16.msra.mxu0 %v70
  %89 = vmatpush.bf16.msra.mxu0 %v69
  %90 = vmatpush.bf16.msra.mxu0 %v68
  %91 = vmatpush.bf16.msra.mxu0 %v67
  %92 = vmatpush.bf16.msra.mxu0 %v66
  %93 = vmatpush.bf16.msra.mxu0 %v65
  %94 = vmatpush.bf16.msra.mxu0 %v64
  %95 = vmatmul.bf16.gmra.mxu0 %v81
  %v96 = vpop.f32.mrf.mxu0
  %v97 = vadd.f32 %v32, %v96
  %v98 = vpop.f32.mrf.mxu0
  %99 = vdwg.mxu0
  %100 = vst [vmem:[%s3] sm:$0xff] %v97
  // Predicated region
  $region14: #{model_forward.14} parent=0 // pred_check
    _
  $region15: #{model_forward.14} parent=0 // pred_check_branch
    %102 = sbr.rel (0) target = $region17
  $region16: #{model_forward.14} parent=0 // pred_region
    _
  $region17: #{model_forward.14} parent=0 // pred_fallthru
    _
  // Predicated region
  $region18: #{model_forward.14} parent=0 // pred_check
    _
  $region19: #{model_forward.14} parent=0 // pred_check_branch
    %104 = sbr.rel (0) target = $region21
  $region20: #{model_forward.14} parent=0 // pred_region
    _
  $region21: #{model_forward.14} parent=0 // pred_fallthru
    _

// kernel: model_forward.17
$region0: #{model_forward.17}
  #allocation0 [shape = 'u32[]', space=smem, size = 0x4, offset = 0x4, fixed_abs, tag = 'smem constant byte address 0x4 - core index']
  #allocation1 [shape = 'u32[72,128]{1,0:T(1,128)}', space=vmem, size = 0x9000, scoped, tag = 'internal scratch']
  %s0 = inlined_call_operand.vmem [shape: bf16[8,40], index: 0, kind: input, shape index: {}]
  %s1 = inlined_call_operand.vmem [shape: bf16[40,128], index: 1, kind: input, shape index: {}]
  %s2 = inlined_call_operand.vmem [shape: f32[1,128], index: 2, kind: input, shape index: {}]
  %s3 = inlined_call_operand.vmem [shape: f32[8,128], index: 3, kind: output, shape index: {}]
  %s4 = sld [smem:[#allocation0]]
  $region22: #{model_forward.17} parent=0
    _
  %s6 = ssub.s32 1, %s4
  %s7 = scalar_select 0, %s6, %s4
  // Predicated region
  $region2: #{model_forward.17} parent=0 // pred_check
    _
  $region3: #{model_forward.17} parent=0 // pred_check_branch
    %9 = sbr.rel (0) target = $region5
  $region4: #{model_forward.17} parent=0 // pred_region
    _
  $region5: #{model_forward.17} parent=0 // pred_fallthru
    _
  // Predicated region
  $region6: #{model_forward.17} parent=0 // pred_check
    _
  $region7: #{model_forward.17} parent=0 // pred_check_branch
    %11 = sbr.rel (0) target = $region9
  $region8: #{model_forward.17} parent=0 // pred_region
    _
  $region9: #{model_forward.17} parent=0 // pred_fallthru
    _
  // Predicated region
  $region10: #{model_forward.17} parent=0 // pred_check
    _
  $region11: #{model_forward.17} parent=0 // pred_check_branch
    %13 = sbr.rel (0) target = $region13
  $region12: #{model_forward.17} parent=0 // pred_region
    _
  $region13: #{model_forward.17} parent=0 // pred_fallthru
    _
  %v15 = vld [vmem:[%s0] sm:$0xf]
  %v16 = vld [vmem:[%s1] sm:$0xf]
  %v17 = vld [vmem:[%s1 + $0x4] sm:$0xf]
  %v18 = vld [vmem:[%s1 + $0x8] sm:$0xf]
  %v19 = vld [vmem:[%s1 + $0xc] sm:$0xf]
  %v20 = vld [vmem:[%s1 + $0x10] sm:$0xf]
  %v21 = vld [vmem:[%s2] sm:$0x1]
  %v23 = vperm.slane %v21, 0
  %v30 = vunpack.c.l.b16 %v16
  %v31 = vunpack.c.l.b16 %v17
  %v32 = vunpack.c.l.b16 %v18
  %v33 = vunpack.c.l.b16 %v19
  %v34 = vunpack.c.l.b16 %v20
  %v35 = vpack.c.b16 %v31, %v30
  %v36 = vpack.c.b16 %v33, %v32
  %v37 = vpack.c.b16 %v34, %v34
  %vm40 = vcmask 326656
  %v42 = vsel %vm40, %v15, 0
  %vm44 = vcmask 1043456
  %v46 = vsel %vm44, %v37, 0
  %48 = vmatpush.bf16.msra.mxu0 0
  %49 = vmatpush.bf16.msra.mxu0 0
  %50 = vmatpush.bf16.msra.mxu0 0
  %51 = vmatpush.bf16.msra.mxu0 0
  %52 = vmatpush.bf16.msra.mxu0 0
  %53 = vmatpush.bf16.msra.mxu0 %v46
  %54 = vmatpush.bf16.msra.mxu0 %v36
  %55 = vmatpush.bf16.msra.mxu0 %v35
  %56 = vmatmul.bf16.gmra.mxu0 %v42
  %v57 = vpop.f32.mrf.mxu0
  %v58 = vadd.f32 %v23, %v57
  %v59 = vpop.f32.mrf.mxu0
  %60 = vdwg.mxu0
  %61 = vst [vmem:[%s3] sm:$0xff] %v58
  // Predicated region
  $region14: #{model_forward.17} parent=0 // pred_check
    _
  $region15: #{model_forward.17} parent=0 // pred_check_branch
    %63 = sbr.rel (0) target = $region17
  $region16: #{model_forward.17} parent=0 // pred_region
    _
  $region17: #{model_forward.17} parent=0 // pred_fallthru
    _
  // Predicated region
  $region18: #{model_forward.17} parent=0 // pred_check
    _
  $region19: #{model_forward.17} parent=0 // pred_check_branch
    %65 = sbr.rel (0) target = $region21
  $region20: #{model_forward.17} parent=0 // pred_region
    _
  $region21: #{model_forward.17} parent=0 // pred_fallthru
    _

// kernel: model_forward.18
$region0: #{model_forward.18}
  #allocation0 [shape = 'u32[]', space=smem, size = 0x4, offset = 0x4, fixed_abs, tag = 'smem constant byte address 0x4 - core index']
  #allocation1 [shape = 'u32[72,128]{1,0:T(1,128)}', space=vmem, size = 0x9000, scoped, tag = 'internal scratch']
  #allocation2 [shape = 'f32[1,64]{1,0:T(1,128)}', space=vmem, size = 0x200, scoped, tag = 'scratch operand']
  #allocation3 [shape = 'f32[1,1]{1,0:T(1,128)}', space=vmem, size = 0x200, scoped, tag = 'scratch operand']
  %s0 = inlined_call_operand.vmem [shape: f32[8,32], index: 0, kind: input, shape index: {}]
  %s1 = inlined_call_operand.vmem [shape: f32[64,32], index: 1, kind: input, shape index: {}]
  %s2 = inlined_call_operand.vmem [shape: f32[8,32], index: 2, kind: output, shape index: {0}]
  %s3 = inlined_call_operand.hbm [shape: f32[1,1], index: 3, kind: output, shape index: {1}]
  %s4 = inlined_call_operand.hbm [shape: f32[1,1], index: 4, kind: output, shape index: {2}]
  %5 = xla_tuple %s2, %s3, %s4
  %s6 = sld [smem:[#allocation0]]
  $region42: #{model_forward.18} parent=0
    _
  %s8 = ssub.s32 1, %s6
  %s9 = scalar_select 0, %s8, %s6
  $region1: #{model_forward.18} parent=0
    #allocation4 [shape = 'u8[512]{0}', space=vmem, size = 0x400, scoped, tag = 'output window, operand 1, single buffered']
    #allocation5 [shape = 's32[1]{0}', space=sflag, size = 0x4, scoped, tag = 'scoped memory for model_forward.18']
    #allocation6 [shape = 'u8[512]{0}', space=vmem, size = 0x400, scoped, tag = 'output window, operand 2, single buffered']
    #allocation7 [shape = 's32[1]{0}', space=sflag, size = 0x4, scoped, tag = 'scoped memory for model_forward.18']
    %10 = vsyncpa [#allocation5], 0
    %11 = vsyncpa [#allocation7], 0
    // Predicated region
    $region2: #{model_forward.18} parent=1 // pred_check
      _
    $region3: #{model_forward.18} parent=1 // pred_check_branch
      %13 = sbr.rel (0) target = $region5
    $region4: #{model_forward.18} parent=1 // pred_region
      _
    $region5: #{model_forward.18} parent=1 // pred_fallthru
      _
    // Predicated region
    $region6: #{model_forward.18} parent=1 // pred_check
      _
    $region7: #{model_forward.18} parent=1 // pred_check_branch
      %15 = sbr.rel (0) target = $region9
    $region8: #{model_forward.18} parent=1 // pred_region
      _
    $region9: #{model_forward.18} parent=1 // pred_fallthru
      _
    %p16 = scmp.eq.s32.totalorder 0, 0
    // Predicated region
    $region10: #{model_forward.18} parent=1 // pred_check
      %p17 = pneg %p16
    $region11: #{model_forward.18} parent=1 // pred_check_branch
      %19 = sbr.rel (%p17) target = $region13
    $region12: #{model_forward.18} parent=1 // pred_region
      %vm20 = vcmask 516096
      %21 = vst.msk [vmem:[#allocation2] sm:$0x1] %vm20, 0.0
      %vm22 = vcmask 0
      %23 = vst.msk [vmem:[#allocation3] sm:$0x1] %vm22, 0.0
    $region13: #{model_forward.18} parent=1 // pred_fallthru
      _
    %v24 = vld [vmem:[%s0] sm:$0xff]
    %v25 = vld [vmem:[%s1] sm:$0xff]
    %v26 = vld [vmem:[%s1 + $0x8] sm:$0xff]
    %v27 = vld [vmem:[%s1 + $0x10] sm:$0xff]
    %v28 = vld [vmem:[%s1 + $0x18] sm:$0xff]
    %v29 = vld [vmem:[%s1 + $0x20] sm:$0xff]
    %v30 = vld [vmem:[%s1 + $0x28] sm:$0xff]
    %v31 = vld [vmem:[%s1 + $0x30] sm:$0xff]
    %v32 = vld [vmem:[%s1 + $0x38] sm:$0xff]
    %v33 = vmul.f32 %v24, %v24
    %vm34 = vcmask 261120
    %v35 = vsel %vm34, %v33, 0.0
    %36 = vadd.xlane.f32.xlu0 %v35
    %v37 = vpop.xlane.xlu0 %36
    %v38 = vmul.f32 %v25, %v25
    %v39 = vmul.f32 %v26, %v26
    %v40 = vmul.f32 %v27, %v27
    %v41 = vmul.f32 %v28, %v28
    %v42 = vmul.f32 %v29, %v29
    %v43 = vmul.f32 %v30, %v30
    %v44 = vmul.f32 %v31, %v31
    %v45 = vmul.f32 %v32, %v32
    %v46 = vsel %vm34, %v38, 0.0
    %47 = vadd.xlane.f32.xlu0 %v46
    %v48 = vpop.xlane.xlu0 %47
    %v49 = vsel %vm34, %v39, 0.0
    %50 = vadd.xlane.f32.xlu0 %v49
    %v51 = vpop.xlane.xlu0 %50
    %v52 = vsel %vm34, %v40, 0.0
    %53 = vadd.xlane.f32.xlu0 %v52
    %v54 = vpop.xlane.xlu0 %53
    %v55 = vsel %vm34, %v41, 0.0
    %56 = vadd.xlane.f32.xlu0 %v55
    %v57 = vpop.xlane.xlu0 %56
    %v58 = vsel %vm34, %v42, 0.0
    %59 = vadd.xlane.f32.xlu0 %v58
    %v60 = vpop.xlane.xlu0 %59
    %v61 = vsel %vm34, %v43, 0.0
    %62 = vadd.xlane.f32.xlu0 %v61
    %v63 = vpop.xlane.xlu0 %62
    %v64 = vsel %vm34, %v44, 0.0
    %65 = vadd.xlane.f32.xlu0 %v64
    %v66 = vpop.xlane.xlu0 %65
    %v67 = vsel %vm34, %v45, 0.0
    %68 = vadd.xlane.f32.xlu0 %v67
    %v69 = vpop.xlane.xlu0 %68
    %v71 = vsel %vm34, %v24, 0
    %v74 = vsel %vm34, %v25, 0
    %v77 = vsel %vm34, %v26, 0
    %v80 = vsel %vm34, %v27, 0
    %v83 = vsel %vm34, %v28, 0
    %v86 = vsel %vm34, %v29, 0
    %v89 = vsel %vm34, %v30, 0
    %v92 = vsel %vm34, %v31, 0
    %v95 = vsel %vm34, %v32, 0
    %97 = vmatpush.xpose.msra.mxu0 0.0
    %98 = vmatpush.xpose.msra.mxu0 0.0
    %99 = vmatpush.xpose.msra.mxu0 0.0
    %100 = vmatpush.xpose.msra.mxu0 0.0
    %101 = vmatpush.xpose.msra.mxu0 0.0
    %102 = vmatpush.xpose.msra.mxu0 0.0
    %103 = vmatpush.xpose.msra.mxu0 0.0
    %104 = vmatpush.xpose.msra.mxu0 0.0
    %105 = vmatpush.xpose.msra.mxu0 %v95
    %106 = vmatpush.xpose.msra.mxu0 %v92
    %107 = vmatpush.xpose.msra.mxu0 %v89
    %108 = vmatpush.xpose.msra.mxu0 %v86
    %109 = vmatpush.xpose.msra.mxu0 %v83
    %110 = vmatpush.xpose.msra.mxu0 %v80
    %111 = vmatpush.xpose.msra.mxu0 %v77
    %112 = vmatpush.xpose.msra.mxu0 %v74
    %113 = vmatmul.f32.gmra.mxu0 %v71
    %v114 = vpop.f32.mrf.mxu0
    %v115 = vadd.f32 0.0, %v114
    %116 = vdwg.mxu0
    %v125 = vlaneseq
    %v126 = vand.u32 %v125, 127
    %v127 = vperm.slane %v48, %v126
    %v128 = vadd.s32 %v126, 4294967288
    %v129 = vperm.slane %v51, %v128
    %vm130 = vcmask 130112
    %v131 = vsel %vm130, %v129, %v127
    %v132 = vadd.s32 %v126, 4294967280
    %v133 = vperm.slane %v54, %v132
    %vm134 = vcmask 195712
    %v135 = vsel %vm134, %v133, %v131
    %v136 = vadd.s32 %v126, 4294967272
    %v137 = vperm.slane %v57, %v136
    %vm138 = vcmask 261312
    %v139 = vsel %vm138, %v137, %v135
    %v140 = vadd.s32 %v126, 4294967264
    %v141 = vperm.slane %v60, %v140
    %vm142 = vcmask 326912
    %v143 = vsel %vm142, %v141, %v139
    %v144 = vadd.s32 %v126, 4294967256
    %v145 = vperm.slane %v63, %v144
    %vm146 = vcmask 392512
    %v147 = vsel %vm146, %v145, %v143
    %v148 = vadd.s32 %v126, 4294967248
    %v149 = vperm.slane %v66, %v148
    %vm150 = vcmask 458112
    %v151 = vsel %vm150, %v149, %v147
    %v152 = vadd.s32 %v126, 4294967240
    %v153 = vperm.slane %v69, %v152
    %vm154 = vcmask 523712
    %v155 = vsel %vm154, %v153, %v151
    %vm156 = vcmask 1042434
    %v157 = vsel %vm156, %v155, %v155
    %vm158 = vcmask 1043459
    %v159 = vsel %vm158, %v155, %v157
    %vm160 = vcmask 1044484
    %v161 = vsel %vm160, %v155, %v159
    %vm162 = vcmask 1045509
    %v163 = vsel %vm162, %v155, %v161
    %vm164 = vcmask 1046534
    %v165 = vsel %vm164, %v155, %v163
    %vm166 = vcmask 1047559
    %v167 = vsel %vm166, %v155, %v165
    %v169 = vadd.f32 %v37, %v167
    %v170 = vmul.f32 %v115, 2.0
    %v171 = vsub.f32 %v169, %v170
    %vm172 = vcmask 523264
    %v173 = vsel %vm172, %v171, inf
    %174 = vmin.xlane.f32.xlu0 %v173
    %v175 = vpop.xlane.xlu0 %174
    %vm176 = vcmp.le.f32.partialorder %v171, %v175
    %v177 = vsel %vm176, %v126, 64
    %v178 = vsel %vm172, %v177, 2147483647
    %v179 = vand.u32 %v178, 65535
    %v180 = vshra.s32 %v178, 16
    %v181 = vcvt.s32.f32 %v179
    %v182 = vcvt.s32.f32 %v180
    %183 = vmin.xlane.f32.xlu0 %v182
    %v184 = vpop.xlane.xlu0 %183
    %vm185 = vcmp.eq.f32.partialorder %v182, %v184
    %v186 = vsel %vm185, %v181, inf
    %187 = vmin.xlane.f32.xlu0 %v186
    %v188 = vpop.xlane.xlu0 %187
    %v189 = vcvt.f32.s32 %v188
    %v190 = vcvt.f32.s32 %v184
    %v191 = vshll.u32 %v190, 16
    %v192 = vadd.s32 %v191, %v189
    %vm193 = vcmp.eq.s32.totalorder %v126, %v192
    %v194 = vsel %vm193, 1, 0
    %v195 = vcvt.s32.f32 %v194
    %v197 = vsel %vm172, %v195, 0
    %199 = vmatpush.msra.mxu0 0.0
    %200 = vmatpush.msra.mxu0 0.0
    %201 = vmatpush.msra.mxu0 0.0
    %202 = vmatpush.msra.mxu0 0.0
    %203 = vmatpush.msra.mxu0 0.0
    %204 = vmatpush.msra.mxu0 0.0
    %205 = vmatpush.msra.mxu0 0.0
    %206 = vmatpush.msra.mxu0 0.0
    %207 = vmatpush.msra.mxu0 %v32
    %208 = vmatpush.msra.mxu0 %v31
    %209 = vmatpush.msra.mxu0 %v30
    %210 = vmatpush.msra.mxu0 %v29
    %211 = vmatpush.msra.mxu0 %v28
    %212 = vmatpush.msra.mxu0 %v27
    %213 = vmatpush.msra.mxu0 %v26
    %214 = vmatpush.msra.mxu0 %v25
    %215 = vmatmul.f32.gmra.mxu0 %v197
    %v216 = vpop.f32.mrf.mxu0
    %v217 = vadd.f32 0.0, %v216
    %218 = vdwg.mxu0
    %219 = vst.msk [vmem:[%s2] sm:$0xff] %vm34, %v217
    %v220 = vlaneseq
    %v221 = vshrl.u32 %v220, 7
    %s222 = smul.u32 0, 8
    %v223 = vstv %s222
    %v224 = vadd.s32 %v221, %v223
    %vm225 = vcmp.lt.s32.totalorder %v224, 8
    %v226 = vsel %vm225, 1, 0
    %v227 = vcvt.s32.f32 %v226
    %v228 = vsub.f32 %v217, %v24
    %v229 = vmul.f32 %v228, %v227
    %v230 = vld [vmem:[#allocation3] sm:$0x1]
    %v231 = vmul.f32 %v229, %v229
    %v232 = vsel %vm34, %v231, 0.0
    %233 = vadd.xlane.f32.xlu0 %v232
    %v234 = vpop.xlane.xlu0 %233
    %v235 = vrot.slane %v234, 4
    %v236 = vadd.f32 %v234, %v235
    %v237 = vrot.slane %v236, 2
    %v238 = vadd.f32 %v236, %v237
    %v239 = vrot.slane %v238, 1
    %v240 = vadd.f32 %v238, %v239
    %s241 = vtos %v240
    %v242 = vstv %s241
    %v243 = vadd.f32 %v230, %v242
    %vm244 = vcmask 0
    %245 = vst.msk [vmem:[#allocation3] sm:$0x1] %vm244, %v243
    %v246 = vld [vmem:[#allocation2] sm:$0x1]
    %v247 = vmul.f32 %v195, %v227
    %v248 = vsel %vm172, %v247, 0.0
    %v249 = vrot.slane %v248, 4
    %v250 = vadd.f32 %v248, %v249
    %v251 = vrot.slane %v250, 2
    %v252 = vadd.f32 %v250, %v251
    %v253 = vrot.slane %v252, 1
    %v254 = vadd.f32 %v252, %v253
    %v255 = vadd.f32 %v246, %v254
    %vm256 = vcmask 516096
    %257 = vst.msk [vmem:[#allocation2] sm:$0x1] %vm256, %v255
    // Predicated region
    $region14: #{model_forward.18} parent=1 // pred_check
      %p258 = pneg %p16
    $region15: #{model_forward.18} parent=1 // pred_check_branch
      %260 = sbr.rel (%p258) target = $region17
    $region16: #{model_forward.18} parent=1 // pred_region
      %v261 = vld [vmem:[#allocation3] sm:$0x1]
      %v262 = vrcp.pop 256.0
      %v263 = vmul.f32 256.0, %v262
      %v264 = vsub.f32 1.0, %v263
      %v265 = vmul.f32 %v262, %v264
      %v266 = vadd.f32 %v262, %v265
      %vm267 = vweird.f32 %v262
      %v268 = vsel %vm267, %v262, %v266
      %v269 = vmul.f32 %v261, %v268
      %v270 = vmul.f32 %v269, 1.25
      %271 = vst.msk [vmem:[#allocation4] sm:$0x1] %vm244, %v270
      %v272 = vld [vmem:[#allocation2] sm:$0x1]
      %v273 = vrcp.pop 8.0
      %v274 = vmul.f32 8.0, %v273
      %v275 = vsub.f32 1.0, %v274
      %v276 = vmul.f32 %v273, %v275
      %v277 = vadd.f32 %v273, %v276
      %vm278 = vweird.f32 %v273
      %v279 = vsel %vm278, %v273, %v277
      %v280 = vmul.f32 %v272, %v279
      %v281 = vadd.f32 %v280, 1e-10
      %v282 = vlog2.pop %v281
      %v283 = vmul.f32 %v282, 0.6931472
      %v284 = vmul.f32 %v280, %v283
      %v285 = vsel %vm256, %v284, 0.0
      %286 = vadd.xlane.f32.xlu0 %v285
      %v287 = vpop.xlane.xlu0 %286
      %v288 = vsub.f32 0.0, %v287
      %v289 = vmul.f32 %v288, 1.442695
      %v290 = vpow.pop %v289
      %291 = vst.msk [vmem:[#allocation6] sm:$0x1] %vm244, %v290
    $region17: #{model_forward.18} parent=1 // pred_fallthru
      _
    // Predicated region
    $region18: #{model_forward.18} parent=1 // pred_check
      _
    $region19: #{model_forward.18} parent=1 // pred_check_branch
      %293 = sbr.rel (0) target = $region21
    $region20: #{model_forward.18} parent=1 // pred_region
      _
    $region21: #{model_forward.18} parent=1 // pred_fallthru
      _
    // Predicated region
    $region22: #{model_forward.18} parent=1 // pred_check
      _
    $region23: #{model_forward.18} parent=1 // pred_check_branch
      %295 = sbr.rel (0) target = $region25
    $region24: #{model_forward.18} parent=1 // pred_region
      %297 = vsyncadd [#allocation5], 0
      %s299 = sshll.u32 [#allocation4], 4
      %s300 = int_to_ptr.vmem [resolvable:$true] %s299
      %s301 = sshll.u32 %s3, 4
      %s302 = int_to_ptr.hbm [resolvable:$true] %s301
      %304 = dma.vmem_to_hbm [thread:$0]  %s300, 16, %s302, [#allocation5]
    $region25: #{model_forward.18} parent=1 // pred_fallthru
      _
    // Predicated region
    $region26: #{model_forward.18} parent=1 // pred_check
      _
    $region27: #{model_forward.18} parent=1 // pred_check_branch
      %306 = sbr.rel (0) target = $region29
    $region28: #{model_forward.18} parent=1 // pred_region
      %308 = vsyncadd [#allocation7], 0
      %s310 = sshll.u32 [#allocation6], 4
      %s311 = int_to_ptr.vmem [resolvable:$true] %s310
      %s312 = sshll.u32 %s4, 4
      %s313 = int_to_ptr.hbm [resolvable:$true] %s312
      %315 = dma.vmem_to_hbm [thread:$0]  %s311, 16, %s313, [#allocation7]
    $region29: #{model_forward.18} parent=1 // pred_fallthru
      _
    // Predicated region
    $region30: #{model_forward.18} parent=1 // pred_check
      _
    $region31: #{model_forward.18} parent=1 // pred_check_branch
      %317 = sbr.rel (0) target = $region33
    $region32: #{model_forward.18} parent=1 // pred_region
      _
    $region33: #{model_forward.18} parent=1 // pred_fallthru
      _
    // Predicated region
    $region34: #{model_forward.18} parent=1 // pred_check
      _
    $region35: #{model_forward.18} parent=1 // pred_check_branch
      %319 = sbr.rel (0) target = $region37
    $region36: #{model_forward.18} parent=1 // pred_region
      %321 = dma.done [#allocation5], 16
    $region37: #{model_forward.18} parent=1 // pred_fallthru
      _
    // Predicated region
    $region38: #{model_forward.18} parent=1 // pred_check
      _
    $region39: #{model_forward.18} parent=1 // pred_check_branch
      %323 = sbr.rel (0) target = $region41
    $region40: #{model_forward.18} parent=1 // pred_region
      %325 = dma.done [#allocation7], 16
    $region41: #{model_forward.18} parent=1 // pred_fallthru
      _
    %326 = vsyncpa [#allocation5], 1
    %327 = vsyncpa [#allocation7], 1

// kernel: model_forward.22
$region0: #{model_forward.22}
  #allocation0 [shape = 'u32[]', space=smem, size = 0x4, offset = 0x4, fixed_abs, tag = 'smem constant byte address 0x4 - core index']
  #allocation1 [shape = 'u32[72,128]{1,0:T(1,128)}', space=vmem, size = 0x9000, scoped, tag = 'internal scratch']
  %s0 = inlined_call_operand.vmem [shape: bf16[16,80], index: 0, kind: input, shape index: {}]
  %s1 = inlined_call_operand.vmem [shape: bf16[80,128], index: 1, kind: input, shape index: {}]
  %s2 = inlined_call_operand.vmem [shape: f32[1,128], index: 2, kind: input, shape index: {}]
  %s3 = inlined_call_operand.vmem [shape: f32[16,128], index: 3, kind: output, shape index: {}]
  %s4 = sld [smem:[#allocation0]]
  $region22: #{model_forward.22} parent=0
    _
  %s6 = ssub.s32 1, %s4
  %s7 = scalar_select 0, %s6, %s4
  // Predicated region
  $region2: #{model_forward.22} parent=0 // pred_check
    _
  $region3: #{model_forward.22} parent=0 // pred_check_branch
    %9 = sbr.rel (0) target = $region5
  $region4: #{model_forward.22} parent=0 // pred_region
    _
  $region5: #{model_forward.22} parent=0 // pred_fallthru
    _
  // Predicated region
  $region6: #{model_forward.22} parent=0 // pred_check
    _
  $region7: #{model_forward.22} parent=0 // pred_check_branch
    %11 = sbr.rel (0) target = $region9
  $region8: #{model_forward.22} parent=0 // pred_region
    _
  $region9: #{model_forward.22} parent=0 // pred_fallthru
    _
  // Predicated region
  $region10: #{model_forward.22} parent=0 // pred_check
    _
  $region11: #{model_forward.22} parent=0 // pred_check_branch
    %13 = sbr.rel (0) target = $region13
  $region12: #{model_forward.22} parent=0 // pred_region
    _
  $region13: #{model_forward.22} parent=0 // pred_fallthru
    _
  %v15 = vld [vmem:[%s0] sm:$0xf]
  %v16 = vld [vmem:[%s0 + $0x4] sm:$0xf]
  %v17 = vld [vmem:[%s1] sm:$0xf]
  %v18 = vld [vmem:[%s1 + $0x4] sm:$0xf]
  %v19 = vld [vmem:[%s1 + $0x8] sm:$0xf]
  %v20 = vld [vmem:[%s1 + $0xc] sm:$0xf]
  %v21 = vld [vmem:[%s1 + $0x10] sm:$0xf]
  %v22 = vld [vmem:[%s1 + $0x14] sm:$0xf]
  %v23 = vld [vmem:[%s1 + $0x18] sm:$0xf]
  %v24 = vld [vmem:[%s1 + $0x1c] sm:$0xf]
  %v25 = vld [vmem:[%s1 + $0x20] sm:$0xf]
  %v26 = vld [vmem:[%s1 + $0x24] sm:$0xf]
  %v27 = vld [vmem:[%s2] sm:$0x1]
  %v29 = vperm.slane %v27, 0
  %v33 = vunpack.c.l.b16 %v15
  %v34 = vunpack.c.l.b16 %v16
  %v35 = vpack.c.b16 %v34, %v33
  %v46 = vunpack.c.l.b16 %v17
  %v47 = vunpack.c.l.b16 %v18
  %v48 = vunpack.c.l.b16 %v19
  %v49 = vunpack.c.l.b16 %v20
  %v50 = vunpack.c.l.b16 %v21
  %v51 = vunpack.c.l.b16 %v22
  %v52 = vunpack.c.l.b16 %v23
  %v53 = vunpack.c.l.b16 %v24
  %v54 = vunpack.c.l.b16 %v25
  %v55 = vunpack.c.l.b16 %v26
  %v56 = vpack.c.b16 %v47, %v46
  %v57 = vpack.c.b16 %v49, %v48
  %v58 = vpack.c.b16 %v51, %v50
  %v59 = vpack.c.b16 %v53, %v52
  %v60 = vpack.c.b16 %v55, %v54
  %vm66 = vcmask 654336
  %v68 = vsel %vm66, %v35, 0
  %70 = vmatpush.bf16.msra.mxu0 0
  %71 = vmatpush.bf16.msra.mxu0 0
  %72 = vmatpush.bf16.msra.mxu0 0
  %73 = vmatpush.bf16.msra.mxu0 %v60
  %74 = vmatpush.bf16.msra.mxu0 %v59
  %75 = vmatpush.bf16.msra.mxu0 %v58
  %76 = vmatpush.bf16.msra.mxu0 %v57
  %77 = vmatpush.bf16.msra.mxu0 %v56
  %78 = vmatmul.bf16.gmra.mxu0 %v68
  %v79 = vpop.f32.mrf.mxu0
  %v80 = vadd.f32 %v29, %v79
  %v81 = vpop.f32.mrf.mxu0
  %v82 = vadd.f32 %v29, %v81
  %83 = vdwg.mxu0
  %v84 = vmax.f32 %v80, 0.0
  %v85 = vmax.f32 %v82, 0.0
  %86 = vst [vmem:[%s3] sm:$0xff] %v84
  %87 = vst [vmem:[%s3 + $0x8] sm:$0xff] %v85
  // Predicated region
  $region14: #{model_forward.22} parent=0 // pred_check
    _
  $region15: #{model_forward.22} parent=0 // pred_check_branch
    %89 = sbr.rel (0) target = $region17
  $region16: #{model_forward.22} parent=0 // pred_region
    _
  $region17: #{model_forward.22} parent=0 // pred_fallthru
    _
  // Predicated region
  $region18: #{model_forward.22} parent=0 // pred_check
    _
  $region19: #{model_forward.22} parent=0 // pred_check_branch
    %91 = sbr.rel (0) target = $region21
  $region20: #{model_forward.22} parent=0 // pred_region
    _
  $region21: #{model_forward.22} parent=0 // pred_fallthru
    _

// kernel: model_forward.23
$region0: #{model_forward.23}
  #allocation0 [shape = 'u32[]', space=smem, size = 0x4, offset = 0x4, fixed_abs, tag = 'smem constant byte address 0x4 - core index']
  #allocation1 [shape = 'u32[72,128]{1,0:T(1,128)}', space=vmem, size = 0x9000, scoped, tag = 'internal scratch']
  %s0 = inlined_call_operand.vmem [shape: bf16[24,40], index: 0, kind: input, shape index: {}]
  %s1 = inlined_call_operand.vmem [shape: bf16[40,2560], index: 1, kind: input, shape index: {}]
  %s2 = inlined_call_operand.vmem [shape: f32[1,2560], index: 2, kind: input, shape index: {}]
  %s3 = inlined_call_operand.vmem [shape: f32[24,2560], index: 3, kind: output, shape index: {}]
  %s4 = sld [smem:[#allocation0]]
  $region87: #{model_forward.23} parent=0
    _
  %s6 = ssub.s32 1, %s4
  %s7 = scalar_select 0, %s6, %s4
  $region1: #{model_forward.23} parent=0
    #allocation2 [shape = 'u8[81920]{0}', space=vmem, size = 0x14000, scoped, tag = 'input window, operand 1']
    #allocation3 [shape = 'u8[98304]{0}', space=vmem, size = 0x18000, scoped, tag = 'output window, operand 0']
    loop: start=0, step=1, limit=7
    $region2: #{model_forward.23} parent=1 // loop_pre_header
      _
    $region3: #{model_forward.23} parent=1 // loop_header
      %s9 = sphi 0, %s13
      %p10 = scmp.ge.s32.totalorder %s9, 7
      %s16 = sphi 0, %s28
      %s17 = sphi 0, %s24
      %s18 = sphi 0, %s16
      %s19 = sphi 0, %s17
      %s20 = sphi 0, %s18
      %s21 = sphi 0, %s19
      %s31 = sphi 0, %s33
      %s34 = sphi 0, %s31
      %s35 = sphi 0, %s34
      %s51 = sphi 0, %s35
      %s57 = sphi 0, %s59
      %s60 = sphi 0, %s57
      %s61 = sphi 0, %s60
      %s77 = sphi 0, %s61
      %s83 = sphi 0, %s85
      %s86 = sphi 0, %s83
      %s87 = sphi 0, %s86
      %s103 = sphi 0, %s87
      %s111 = sphi 0, %s113
      %s114 = sphi 0, %s111
      %s115 = sphi 0, %s114
      %s131 = sphi 0, %s115
    $region4: #{model_forward.23} parent=1 // loop_header_branch
      %12 = sbr.rel (%p10) target = $region8
    $region5: #{model_forward.23} parent=1 // loop_body
      %s14 = ssub.s32 %s9, 1
      %s15 = ssub.s32 %s9, 2
      %s22 = sadd.s32 1, %s17
      %p23 = scmp.ge.s32.totalorder %s22, 5
      %s24 = scalar_select %p23, 0, %s22
      %s25 = sadd.s32 1, %s16
      %s26 = scalar_select %p23, %s25, %s16
      %p27 = scmp.ge.s32.totalorder %s26, 1
      %s28 = scalar_select %p27, 0, %s26
      %s29 = ssub.s32 %s16, %s28
      %p30 = scmp.eq.s32.totalorder %s29, 0
      %s32 = sadd.s32 %s31, 1
      %s33 = scalar_select %p30, %s31, %s32
      %p36 = pneg %p30
      %p37 = scmp.eq.s32.totalorder %s9, 4
      %p38 = por %p36, %p37
      %p39 = scmp.ne.s32.totalorder %s31, %s34
      %p40 = scmp.eq.s32.totalorder %s9, 0
      %p41 = por %p39, %p40
      %p42 = scmp.ne.s32.totalorder %s31, %s34
      %p43 = scmp.eq.s32.totalorder %s14, 4
      %p44 = por %p42, %p43
      %p45 = scmp.ne.s32.totalorder %s34, %s35
      %p46 = scmp.eq.s32.totalorder %s14, 0
      %p47 = por %p45, %p46
      %p48 = scmp.ne.s32.totalorder %s34, %s35
      %p49 = scmp.eq.s32.totalorder %s15, 4
      %p50 = por %p48, %p49
      %p52 = scmp.ne.s32.totalorder %s35, %s51
      %p53 = scmp.eq.s32.totalorder %s15, 0
      %p54 = por %p52, %p53
      %s55 = ssub.s32 %s17, %s24
      %p56 = scmp.eq.s32.totalorder %s55, 0
      %s58 = sadd.s32 %s57, 1
      %s59 = scalar_select %p56, %s57, %s58
      %p62 = pneg %p56
      %p63 = scmp.eq.s32.totalorder %s9, 4
      %p64 = por %p62, %p63
      %p65 = scmp.ne.s32.totalorder %s57, %s60
      %p66 = scmp.eq.s32.totalorder %s9, 0
      %p67 = por %p65, %p66
      %p68 = scmp.ne.s32.totalorder %s57, %s60
      %p69 = scmp.eq.s32.totalorder %s14, 4
      %p70 = por %p68, %p69
      %p71 = scmp.ne.s32.totalorder %s60, %s61
      %p72 = scmp.eq.s32.totalorder %s14, 0
      %p73 = por %p71, %p72
      %p74 = scmp.ne.s32.totalorder %s60, %s61
      %p75 = scmp.eq.s32.totalorder %s15, 4
      %p76 = por %p74, %p75
      %p78 = scmp.ne.s32.totalorder %s61, %s77
      %p79 = scmp.eq.s32.totalorder %s15, 0
      %p80 = por %p78, %p79
      %s81 = ssub.s32 %s17, %s24
      %p82 = scmp.eq.s32.totalorder %s81, 0
      %s84 = sadd.s32 %s83, 1
      %s85 = scalar_select %p82, %s83, %s84
      %p88 = pneg %p82
      %p89 = scmp.eq.s32.totalorder %s9, 4
      %p90 = por %p88, %p89
      %p91 = scmp.ne.s32.totalorder %s83, %s86
      %p92 = scmp.eq.s32.totalorder %s9, 0
      %p93 = por %p91, %p92
      %p94 = scmp.ne.s32.totalorder %s83, %s86
      %p95 = scmp.eq.s32.totalorder %s14, 4
      %p96 = por %p94, %p95
      %p97 = scmp.ne.s32.totalorder %s86, %s87
      %p98 = scmp.eq.s32.totalorder %s14, 0
      %p99 = por %p97, %p98
      %p100 = scmp.ne.s32.totalorder %s86, %s87
      %p101 = scmp.eq.s32.totalorder %s15, 4
      %p102 = por %p100, %p101
      %p104 = scmp.ne.s32.totalorder %s87, %s103
      %p105 = scmp.eq.s32.totalorder %s15, 0
      %p106 = por %p104, %p105
      %s107 = ssub.s32 %s16, %s28
      %s108 = ssub.s32 %s17, %s24
      %s109 = sor.u32 %s107, %s108
      %p110 = scmp.eq.s32.totalorder %s109, 0
      %s112 = sadd.s32 %s111, 1
      %s113 = scalar_select %p110, %s111, %s112
      %p116 = pneg %p110
      %p117 = scmp.eq.s32.totalorder %s9, 4
      %p118 = por %p116, %p117
      %p119 = scmp.ne.s32.totalorder %s111, %s114
      %p120 = scmp.eq.s32.totalorder %s9, 0
      %p121 = por %p119, %p120
      %p122 = scmp.ne.s32.totalorder %s111, %s114
      %p123 = scmp.eq.s32.totalorder %s14, 4
      %p124 = por %p122, %p123
      %p125 = scmp.ne.s32.totalorder %s114, %s115
      %p126 = scmp.eq.s32.totalorder %s14, 0
      %p127 = por %p125, %p126
      %p128 = scmp.ne.s32.totalorder %s114, %s115
      %p129 = scmp.eq.s32.totalorder %s15, 4
      %p130 = por %p128, %p129
      %p132 = scmp.ne.s32.totalorder %s115, %s131
      %p133 = scmp.eq.s32.totalorder %s15, 0
      %p134 = por %p132, %p133
      %p135 = scmp.le.s32.totalorder 1, %s9
      %p136 = scmp.lt.s32.totalorder %s9, 6
      %p137 = pnand %p135, %p136
      %p138 = pneg %p137
      // Predicated region
      $region9: #{model_forward.23} parent=5 // pred_check
        _
      $region10: #{model_forward.23} parent=5 // pred_check_branch
        %140 = sbr.rel (%p137) target = $region12
      $region11: #{model_forward.23} parent=5 // pred_region
        %s141 = ssub.s32 %s9, 1
        // Predicated region
        $region13: #{model_forward.23} parent=11 // pred_check
          %p142 = pneg %p47
        $region14: #{model_forward.23} parent=11 // pred_check_branch
          %144 = sbr.rel (%p142) target = $region16
        $region15: #{model_forward.23} parent=11 // pred_region
          %s145 = smul.u32 3, %s18
          %p146 = scmp.lt.s32.totalorder %s145, 2
          %s147 = scalar_select %p146, %s145, 2
          %s148 = smul.addr %s147, 4
          %s149 = scalar_lea.vmem %s0, %s148
          %s150 = smul.u32 3, %s18
        $region16: #{model_forward.23} parent=11 // pred_fallthru
          _
      $region12: #{model_forward.23} parent=5 // pred_fallthru
        _
      %p151 = scmp.lt.s32.totalorder %s9, 5
      // Predicated region
      $region17: #{model_forward.23} parent=5 // pred_check
        %p152 = pneg %p151
      $region18: #{model_forward.23} parent=5 // pred_check_branch
        %154 = sbr.rel (%p152) target = $region20
      $region19: #{model_forward.23} parent=5 // pred_region
        // Predicated region
        $region21: #{model_forward.23} parent=19 // pred_check
          %p155 = pneg %p67
        $region22: #{model_forward.23} parent=19 // pred_check_branch
          %157 = sbr.rel (%p155) target = $region24
        $region23: #{model_forward.23} parent=19 // pred_region
          %s158 = sand.u32 %s57, 1
          %s159 = sand.u32 %s57, 1
          %s160 = smul.addr %s159, 80
          %s161 = scalar_lea.vmem [#allocation2], %s160
          %s162 = smul.u32 4, %s17
          %s163 = smul.addr %s162, 4
          %s164 = scalar_lea.vmem %s1, %s163
          // Predicated region
          $region25: #{model_forward.23} parent=23 // pred_check
            _
          $region26: #{model_forward.23} parent=23 // pred_check_branch
            %166 = sbr.rel (0) target = $region28
          $region27: #{model_forward.23} parent=23 // pred_region
            // Predicated region
            $region29: #{model_forward.23} parent=27 // pred_check
              _
            $region30: #{model_forward.23} parent=27 // pred_check_branch
              %168 = sbr.rel (0) target = $region32
            $region31: #{model_forward.23} parent=27 // pred_region
              loop: start=0, step=1, limit=1
              $region33: #{model_forward.23} parent=31 // loop_pre_header
                _
              $region34: #{model_forward.23} parent=31 // loop_header
                %s170 = sphi 0, %s174
                %p171 = scmp.ge.s32.totalorder %s170, 1
                %s175 = sphi %s164, %s164
                %s176 = sphi %s161, %s161
              $region35: #{model_forward.23} parent=31 // loop_header_branch
                %173 = sbr.rel (%p171) target = $region39
              $region36: #{model_forward.23} parent=31 // loop_body
                %v177 = vld [vmem:[%s175] sm:$0xff]
                %178 = vst [vmem:[%s176] sm:$0xff] %v177
                %v179 = vld [vmem:[%s175 + $0x8] sm:$0xff]
                %180 = vst [vmem:[%s176 + $0x8] sm:$0xff] %v179
                %v181 = vld [vmem:[%s175 + $0x50] sm:$0xff]
                %182 = vst [vmem:[%s176 + $0x10] sm:$0xff] %v181
                %v183 = vld [vmem:[%s175 + $0x58] sm:$0xff]
                %184 = vst [vmem:[%s176 + $0x18] sm:$0xff] %v183
                %v185 = vld [vmem:[%s175 + $0xa0] sm:$0xff]
                %186 = vst [vmem:[%s176 + $0x20] sm:$0xff] %v185
                %v187 = vld [vmem:[%s175 + $0xa8] sm:$0xff]
                %188 = vst [vmem:[%s176 + $0x28] sm:$0xff] %v187
                %v189 = vld [vmem:[%s175 + $0xf0] sm:$0xff]
                %190 = vst [vmem:[%s176 + $0x30] sm:$0xff] %v189
                %v191 = vld [vmem:[%s175 + $0xf8] sm:$0xff]
                %192 = vst [vmem:[%s176 + $0x38] sm:$0xff] %v191
                %v193 = vld [vmem:[%s175 + $0x140] sm:$0xff]
                %194 = vst [vmem:[%s176 + $0x40] sm:$0xff] %v193
                %v195 = vld [vmem:[%s175 + $0x148] sm:$0xff]
                %196 = vst [vmem:[%s176 + $0x48] sm:$0xff] %v195
              $region37: #{model_forward.23} parent=31 // loop_footer
                %s174 = sadd.s32 1, %s170
              $region38: #{model_forward.23} parent=31 // loop_footer_branch
                %169 = sbr.rel target = $region34
              $region39: #{model_forward.23} parent=31 // loop_exit
                _
            $region32: #{model_forward.23} parent=27 // pred_fallthru
              _
            // Predicated region
            $region40: #{model_forward.23} parent=27 // pred_check
              _
            $region41: #{model_forward.23} parent=27 // pred_check_branch
              %198 = sbr.rel target = $region43
            $region42: #{model_forward.23} parent=27 // pred_region
              _
            $region43: #{model_forward.23} parent=27 // pred_fallthru
              _
          $region28: #{model_forward.23} parent=23 // pred_fallthru
            _
          %199 = vnop
        $region24: #{model_forward.23} parent=19 // pred_fallthru
          _
        // Predicated region
        $region44: #{model_forward.23} parent=19 // pred_check
          %p200 = pneg %p93
        $region45: #{model_forward.23} parent=19 // pred_check_branch
          %202 = sbr.rel (%p200) target = $region47
        $region46: #{model_forward.23} parent=19 // pred_region
          %s203 = smul.u32 4, %s17
          %p204 = scmp.lt.s32.totalorder %s203, 19
          %s205 = scalar_select %p204, %s203, 19
          %s206 = scalar_lea.vmem %s2, %s205
          %s207 = smul.u32 4, %s17
        $region47: #{model_forward.23} parent=19 // pred_fallthru
          _
      $region20: #{model_forward.23} parent=5 // pred_fallthru
        _
      %p208 = scmp.le.s32.totalorder 1, %s9
      %p209 = scmp.lt.s32.totalorder %s9, 6
      %p210 = pnand %p208, %p209
      %p211 = pneg %p210
      // Predicated region
      $region48: #{model_forward.23} parent=5 // pred_check
        _
      $region49: #{model_forward.23} parent=5 // pred_check_branch
        %213 = sbr.rel (%p210) target = $region51
      $region50: #{model_forward.23} parent=5 // pred_region
        %s214 = ssub.s32 %s9, 1
        %s215 = sand.u32 %s60, 1
        %s216 = sand.u32 %s60, 1
        %s217 = smul.addr %s216, 80
        %s218 = scalar_lea.vmem [#allocation2], %s217
        // Predicated region
        $region52: #{model_forward.23} parent=50 // pred_check
          %p219 = pneg %p73
        $region53: #{model_forward.23} parent=50 // pred_check_branch
          %221 = sbr.rel (%p219) target = $region55
        $region54: #{model_forward.23} parent=50 // pred_region
          _
        $region55: #{model_forward.23} parent=50 // pred_fallthru
          _
        %s222 = smul.u32 3, %s18
        %p223 = scmp.lt.s32.totalorder %s222, 2
        %s224 = scalar_select %p223, %s222, 2
        %s225 = smul.addr %s224, 4
        %s226 = scalar_lea.vmem %s0, %s225
        %p227 = pneg %p47
        %p228 = pneg %p44
        %s229 = sand.u32 %s60, 1
        %s230 = sand.u32 %s60, 1
        %s231 = smul.addr %s230, 80
        %s232 = scalar_lea.vmem [#allocation2], %s231
        %p233 = pneg %p73
        %p234 = pneg %p70
        %s235 = smul.u32 4, %s19
        %p236 = scmp.lt.s32.totalorder %s235, 19
        %s237 = scalar_select %p236, %s235, 19
        %s238 = scalar_lea.vmem %s2, %s237
        %p239 = pneg %p99
        %p240 = pneg %p96
        %p241 = pneg %p127
        %p242 = pneg %p124
        %s243 = sand.u32 %s114, 1
        %s244 = sand.u32 %s114, 1
        %s245 = smul.addr %s244, 96
        %s246 = scalar_lea.vmem [#allocation3], %s245
        %s247 = smul.u32 3, %s18
        %p248 = scmp.lt.s32.totalorder %s247, 2
        %s249 = scalar_select %p248, %s247, 2
        %s250 = smul.addr %s249, 4
        %s251 = scalar_lea.vmem %s0, %s250
        %s252 = smul.u32 3, %s18
        %s253 = smul.u32 4, %s19
        %s254 = smul.u32 4, %s19
        %p255 = scmp.lt.s32.totalorder %s254, 19
        %s256 = scalar_select %p255, %s254, 19
        %s257 = scalar_lea.vmem %s2, %s256
        %s258 = smul.u32 4, %s19
        %s259 = smul.u32 3, %s18
        %s260 = smul.u32 4, %s19
        %v262 = vld [vmem:[%s251] sm:$0xf]
        %v263 = vld [vmem:[%s251 + $0x4] sm:$0xf]
        %v264 = vld [vmem:[%s251 + $0x8] sm:$0xf]
        %v265 = vld [vmem:[%s218] sm:$0xff]
        %v266 = vld [vmem:[%s218 + $0x8] sm:$0xff]
        %v267 = vld [vmem:[%s218 + $0x10] sm:$0xff]
        %v268 = vld [vmem:[%s218 + $0x18] sm:$0xff]
        %v269 = vld [vmem:[%s218 + $0x20] sm:$0xff]
        %v270 = vld [vmem:[%s218 + $0x28] sm:$0xff]
        %v271 = vld [vmem:[%s218 + $0x30] sm:$0xff]
        %v272 = vld [vmem:[%s218 + $0x38] sm:$0xff]
        %v273 = vld [vmem:[%s218 + $0x40] sm:$0xff]
        %v274 = vld [vmem:[%s218 + $0x48] sm:$0xff]
        %v275 = vld [vmem:[%s257] sm:$0xf]
        %v277 = vperm.slane %v275, 0
        %v278 = vperm.slane %v275, 1
        %v279 = vperm.slane %v275, 2
        %v280 = vperm.slane %v275, 3
        %v288 = vunpack.c.l.b16 %v262
        %v289 = vunpack.c.l.b16 %v263
        %v290 = vunpack.c.l.b16 %v264
        %v291 = vpack.c.b16 %v289, %v288
        %v292 = vpack.c.b16 %v290, %v290
        %v303 = vunpack.c.l.b16 %v265
        %v304 = vunpack.c.h.b16 %v265
        %v305 = vunpack.c.l.b16 %v266
        %v306 = vunpack.c.h.b16 %v266
        %v307 = vunpack.c.l.b16 %v267
        %v308 = vunpack.c.h.b16 %v267
        %v309 = vunpack.c.l.b16 %v268
        %v310 = vunpack.c.h.b16 %v268
        %v311 = vunpack.c.l.b16 %v269
        %v312 = vunpack.c.h.b16 %v269
        %v313 = vunpack.c.l.b16 %v270
        %v314 = vunpack.c.h.b16 %v270
        %v315 = vunpack.c.l.b16 %v271
        %v316 = vunpack.c.h.b16 %v271
        %v317 = vunpack.c.l.b16 %v272
        %v318 = vunpack.c.h.b16 %v272
        %v319 = vunpack.c.l.b16 %v273
        %v320 = vunpack.c.h.b16 %v273
        %v321 = vunpack.c.l.b16 %v274
        %v322 = vunpack.c.h.b16 %v274
        %v323 = vpack.c.b16 %v307, %v303
        %v324 = vpack.c.b16 %v308, %v304
        %v325 = vpack.c.b16 %v309, %v305
        %v326 = vpack.c.b16 %v310, %v306
        %v327 = vpack.c.b16 %v315, %v311
        %v328 = vpack.c.b16 %v316, %v312
        %v329 = vpack.c.b16 %v317, %v313
        %v330 = vpack.c.b16 %v318, %v314
        %v331 = vpack.c.b16 %v319, %v319
        %v332 = vpack.c.b16 %v320, %v320
        %v333 = vpack.c.b16 %v321, %v321
        %v334 = vpack.c.b16 %v322, %v322
        %vm343 = vcmask 326656
        %v345 = vsel %vm343, %v291, 0
        %v348 = vsel %vm343, %v292, 0
        %vm350 = vcmask 1043456
        %v352 = vsel %vm350, %v331, 0
        %v355 = vsel %vm350, %v332, 0
        %v358 = vsel %vm350, %v333, 0
        %v361 = vsel %vm350, %v334, 0
        %363 = vmatpush.bf16.msra.mxu0 0
        %364 = vmatpush.bf16.msra.mxu0 0
        %365 = vmatpush.bf16.msra.mxu0 0
        %366 = vmatpush.bf16.msra.mxu0 0
        %367 = vmatpush.bf16.msra.mxu0 0
        %368 = vmatpush.bf16.msra.mxu0 %v352
        %369 = vmatpush.bf16.msra.mxu0 %v327
        %370 = vmatpush.bf16.msra.mxu0 %v323
        %371 = vmatmul.bf16.gmra.mxu0 %v345
        %v372 = vpop.f32.mrf.mxu0
        %v373 = vadd.f32 %v277, %v372
        %v374 = vpop.f32.mrf.mxu0
        %v375 = vadd.f32 %v277, %v374
        %376 = vmatmul.bf16.gmra.mxu0 %v348
        %v377 = vpop.f32.mrf.mxu0
        %v378 = vadd.f32 %v277, %v377
        %v379 = vpop.f32.mrf.mxu0
        %380 = vdwg.mxu0
        %381 = vmatpush.bf16.msra.mxu0 0
        %382 = vmatpush.bf16.msra.mxu0 0
        %383 = vmatpush.bf16.msra.mxu0 0
        %384 = vmatpush.bf16.msra.mxu0 0
        %385 = vmatpush.bf16.msra.mxu0 0
        %386 = vmatpush.bf16.msra.mxu0 %v355
        %387 = vmatpush.bf16.msra.mxu0 %v328
        %388 = vmatpush.bf16.msra.mxu0 %v324
        %389 = vmatmul.bf16.gmra.mxu0 %v345
        %v390 = vpop.f32.mrf.mxu0
        %v391 = vadd.f32 %v278, %v390
        %v392 = vpop.f32.mrf.mxu0
        %v393 = vadd.f32 %v278, %v392
        %394 = vmatmul.bf16.gmra.mxu0 %v348
        %v395 = vpop.f32.mrf.mxu0
        %v396 = vadd.f32 %v278, %v395
        %v397 = vpop.f32.mrf.mxu0
        %398 = vdwg.mxu0
        %399 = vmatpush.bf16.msra.mxu0 0
        %400 = vmatpush.bf16.msra.mxu0 0
        %401 = vmatpush.bf16.msra.mxu0 0
        %402 = vmatpush.bf16.msra.mxu0 0
        %403 = vmatpush.bf16.msra.mxu0 0
        %404 = vmatpush.bf16.msra.mxu0 %v358
        %405 = vmatpush.bf16.msra.mxu0 %v329
        %406 = vmatpush.bf16.msra.mxu0 %v325
        %407 = vmatmul.bf16.gmra.mxu0 %v345
        %v408 = vpop.f32.mrf.mxu0
        %v409 = vadd.f32 %v279, %v408
        %v410 = vpop.f32.mrf.mxu0
        %v411 = vadd.f32 %v279, %v410
        %412 = vmatmul.bf16.gmra.mxu0 %v348
        %v413 = vpop.f32.mrf.mxu0
        %v414 = vadd.f32 %v279, %v413
        %v415 = vpop.f32.mrf.mxu0
        %416 = vdwg.mxu0
        %417 = vmatpush.bf16.msra.mxu0 0
        %418 = vmatpush.bf16.msra.mxu0 0
        %419 = vmatpush.bf16.msra.mxu0 0
        %420 = vmatpush.bf16.msra.mxu0 0
        %421 = vmatpush.bf16.msra.mxu0 0
        %422 = vmatpush.bf16.msra.mxu0 %v361
        %423 = vmatpush.bf16.msra.mxu0 %v330
        %424 = vmatpush.bf16.msra.mxu0 %v326
        %425 = vmatmul.bf16.gmra.mxu0 %v345
        %v426 = vpop.f32.mrf.mxu0
        %v427 = vadd.f32 %v280, %v426
        %v428 = vpop.f32.mrf.mxu0
        %v429 = vadd.f32 %v280, %v428
        %430 = vmatmul.bf16.gmra.mxu0 %v348
        %v431 = vpop.f32.mrf.mxu0
        %v432 = vadd.f32 %v280, %v431
        %v433 = vpop.f32.mrf.mxu0
        %434 = vdwg.mxu0
        %435 = vst [vmem:[%s246] sm:$0xff] %v373
        %436 = vst [vmem:[%s246 + $0x8] sm:$0xff] %v391
        %437 = vst [vmem:[%s246 + $0x10] sm:$0xff] %v409
        %438 = vst [vmem:[%s246 + $0x18] sm:$0xff] %v427
        %439 = vst [vmem:[%s246 + $0x20] sm:$0xff] %v375
        %440 = vst [vmem:[%s246 + $0x28] sm:$0xff] %v393
        %441 = vst [vmem:[%s246 + $0x30] sm:$0xff] %v411
        %442 = vst [vmem:[%s246 + $0x38] sm:$0xff] %v429
        %443 = vst [vmem:[%s246 + $0x40] sm:$0xff] %v378
        %444 = vst [vmem:[%s246 + $0x48] sm:$0xff] %v396
        %445 = vst [vmem:[%s246 + $0x50] sm:$0xff] %v414
        %446 = vst [vmem:[%s246 + $0x58] sm:$0xff] %v432
        %s447 = sand.u32 %s114, 1
        %s448 = sand.u32 %s114, 1
        %s449 = smul.addr %s448, 96
        %s450 = scalar_lea.vmem [#allocation3], %s449
        // Predicated region
        $region56: #{model_forward.23} parent=50 // pred_check
          %p451 = pneg %p124
        $region57: #{model_forward.23} parent=50 // pred_check_branch
          %453 = sbr.rel (%p451) target = $region59
        $region58: #{model_forward.23} parent=50 // pred_region
          %s454 = smul.u32 3, %s18
          %s455 = smul.u32 4, %s19
          %s456 = smul.addr %s454, 20
          %s457 = sadd.s32 %s455, %s456
          %s458 = smul.addr %s457, 8
          %s459 = scalar_lea.vmem %s3, %s458
          // Predicated region
          $region60: #{model_forward.23} parent=58 // pred_check
            _
          $region61: #{model_forward.23} parent=58 // pred_check_branch
            %461 = sbr.rel (0) target = $region63
          $region62: #{model_forward.23} parent=58 // pred_region
            // Predicated region
            $region64: #{model_forward.23} parent=62 // pred_check
              _
            $region65: #{model_forward.23} parent=62 // pred_check_branch
              %463 = sbr.rel (0) target = $region67
            $region66: #{model_forward.23} parent=62 // pred_region
              loop: start=0, step=1, limit=1
              $region68: #{model_forward.23} parent=66 // loop_pre_header
                _
              $region69: #{model_forward.23} parent=66 // loop_header
                %s465 = sphi 0, %s469
                %p466 = scmp.ge.s32.totalorder %s465, 1
                %s470 = sphi %s450, %s450
                %s471 = sphi %s459, %s459
              $region70: #{model_forward.23} parent=66 // loop_header_branch
                %468 = sbr.rel (%p466) target = $region74
              $region71: #{model_forward.23} parent=66 // loop_body
                %v472 = vld [vmem:[%s470] sm:$0xff]
                %473 = vst [vmem:[%s471] sm:$0xff] %v472
                %v474 = vld [vmem:[%s470 + $0x8] sm:$0xff]
                %475 = vst [vmem:[%s471 + $0x8] sm:$0xff] %v474
                %v476 = vld [vmem:[%s470 + $0x10] sm:$0xff]
                %477 = vst [vmem:[%s471 + $0x10] sm:$0xff] %v476
                %v478 = vld [vmem:[%s470 + $0x18] sm:$0xff]
                %479 = vst [vmem:[%s471 + $0x18] sm:$0xff] %v478
                %v480 = vld [vmem:[%s470 + $0x20] sm:$0xff]
                %481 = vst [vmem:[%s471 + $0xa0] sm:$0xff] %v480
                %v482 = vld [vmem:[%s470 + $0x28] sm:$0xff]
                %483 = vst [vmem:[%s471 + $0xa8] sm:$0xff] %v482
                %v484 = vld [vmem:[%s470 + $0x30] sm:$0xff]
                %485 = vst [vmem:[%s471 + $0xb0] sm:$0xff] %v484
                %v486 = vld [vmem:[%s470 + $0x38] sm:$0xff]
                %487 = vst [vmem:[%s471 + $0xb8] sm:$0xff] %v486
                %v488 = vld [vmem:[%s470 + $0x40] sm:$0xff]
                %489 = vst [vmem:[%s471 + $0x140] sm:$0xff] %v488
                %v490 = vld [vmem:[%s470 + $0x48] sm:$0xff]
                %491 = vst [vmem:[%s471 + $0x148] sm:$0xff] %v490
                %v492 = vld [vmem:[%s470 + $0x50] sm:$0xff]
                %493 = vst [vmem:[%s471 + $0x150] sm:$0xff] %v492
                %v494 = vld [vmem:[%s470 + $0x58] sm:$0xff]
                %495 = vst [vmem:[%s471 + $0x158] sm:$0xff] %v494
              $region72: #{model_forward.23} parent=66 // loop_footer
                %s469 = sadd.s32 1, %s465
              $region73: #{model_forward.23} parent=66 // loop_footer_branch
                %464 = sbr.rel target = $region69
              $region74: #{model_forward.23} parent=66 // loop_exit
                _
            $region67: #{model_forward.23} parent=62 // pred_fallthru
              _
            // Predicated region
            $region75: #{model_forward.23} parent=62 // pred_check
              _
            $region76: #{model_forward.23} parent=62 // pred_check_branch
              %497 = sbr.rel target = $region78
            $region77: #{model_forward.23} parent=62 // pred_region
              _
            $region78: #{model_forward.23} parent=62 // pred_fallthru
              _
          $region63: #{model_forward.23} parent=58 // pred_fallthru
            _
          %498 = vnop
        $region59: #{model_forward.23} parent=50 // pred_fallthru
          _
      $region51: #{model_forward.23} parent=5 // pred_fallthru
        _
      %p499 = scmp.le.s32.totalorder 2, %s9
      // Predicated region
      $region79: #{model_forward.23} parent=5 // pred_check
        %p500 = pneg %p499
      $region80: #{model_forward.23} parent=5 // pred_check_branch
        %502 = sbr.rel (%p500) target = $region82
      $region81: #{model_forward.23} parent=5 // pred_region
        %s503 = ssub.s32 %s9, 2
        // Predicated region
        $region83: #{model_forward.23} parent=81 // pred_check
          %p504 = pneg %p130
        $region84: #{model_forward.23} parent=81 // pred_check_branch
          %506 = sbr.rel (%p504) target = $region86
        $region85: #{model_forward.23} parent=81 // pred_region
          %s507 = sand.u32 %s115, 1
          %s508 = sand.u32 %s115, 1
          %s509 = smul.addr %s508, 96
          %s510 = scalar_lea.vmem [#allocation3], %s509
        $region86: #{model_forward.23} parent=81 // pred_fallthru
          _
      $region82: #{model_forward.23} parent=5 // pred_fallthru
        _
    $region6: #{model_forward.23} parent=1 // loop_footer
      %s13 = sadd.s32 1, %s9
    $region7: #{model_forward.23} parent=1 // loop_footer_branch
      %8 = sbr.rel target = $region3
    $region8: #{model_forward.23} parent=1 // loop_exit
      _

</llo_original>
